<compile_context>
chip_gen: v6e
topology: v6e:2x2x1
jax: 0.10.0
libtpu: 0.0.40
codegen_flags: <defaults>
</compile_context>

<pallas_src>
import functools

import numpy as np
import jax
import jax.numpy as jnp
from jax import lax
from jax.experimental import pallas as pl
from jax.experimental.pallas import tpu as pltpu

# ----------------------------- synthetic model hyper-parameters ----------------
C, H, W = 3, 16, 16          # input image (NCHW, N handled in glue: batch 0 only)
PATCH = 4                    # patch size of the synthetic patch embedding
N_PATCH = (H // PATCH) * (W // PATCH)   # 16 tokens
CPP = C * PATCH * PATCH                 # 48  (flattened patch)
D = 32                       # feature / prototype dim
P = 8                        # number of prototypes
K = 4                        # sub-prototypes per prototype
_EPS = 1e-6


def _patchify(img_chw, p=PATCH):
    """(C, H, W) -> (N_patches, C*p*p), row-major over (H//p, W//p)."""
    c, h, w = img_chw.shape
    t = img_chw.reshape(c, h // p, p, w // p, p)
    t = jnp.transpose(t, (1, 3, 0, 2, 4))
    return t.reshape((h // p) * (w // p), c * p * p)


# ----------------------------------- kernel ------------------------------------
def _ppnet_adv_kernel(xim_ref, wemb_ref, proto_ref, act_ref, *,
                      n_patch, n_proto, n_sub):
    assert (n_patch & (n_patch - 1)) == 0, "n_patch must be a power of two"
    n_shift = int(np.log2(n_patch))
    kn = n_sub * n_patch                                        # 64

    # 1) adversarial blend: x2 = x * mask + img * (1 - mask)   (single stacked input)
    x = xim_ref[0]                                              # (N, CPP)
    im = xim_ref[1]
    mk = xim_ref[2]
    x2 = x * mk + im * (1.0 - mk)

    # 2) patch embedding (bf16 MXU operands, f32 accumulate) + L2 norm in f32
    f = jnp.dot(x2.astype(jnp.bfloat16), wemb_ref[...].astype(jnp.bfloat16),
                preferred_element_type=jnp.float32)             # (N, D)
    f = f * lax.rsqrt(jnp.sum(f * f, axis=-1, keepdims=True) + _EPS)

    # 3) cosine similarity of every sub-prototype vs every token (one matmul)
    #    proto_ref rows are k-major: row = k * P + p
    pv = proto_ref[...]                                         # (K*P, D)
    pv = pv * lax.rsqrt(jnp.sum(pv * pv, axis=-1, keepdims=True) + _EPS)
    sim_kp = lax.dot_general(pv.astype(jnp.bfloat16), f.astype(jnp.bfloat16),
                             (((1,), (1,)), ((), ())),
                             preferred_element_type=jnp.float32)  # (K*P, N)
    # re-pack to (P, K*N): aligned 8-sublane slices + lane concat; column = k*N + n
    s = jnp.concatenate(
        [sim_kp[k * n_proto:(k + 1) * n_proto, :] for k in range(n_sub)], axis=1)

    # 4) greedy distinct-patch matching, all P prototypes at once, K rounds.
    #    Per round: 1 lane max-reduce (value) + 1 lane min-reduce (first argmax),
    #    all in f32 so the `masked >= best` exact-equality argmax stays exact.
    lane = lax.broadcasted_iota(jnp.int32, (n_proto, kn), 1)    # flat idx = k*N + n
    k_of = lane >> n_shift
    n_of = lane & (n_patch - 1)

    valid = jnp.ones((n_proto, kn), jnp.bool_)
    acc = jnp.zeros((n_proto, 1), jnp.float32)
    for _ in range(n_sub):
        masked = jnp.where(valid, s, -1e30)
        best = jnp.max(masked, axis=1, keepdims=True)           # (P, 1)
        cand = jnp.where(masked >= best, lane, jnp.int32(kn))
        idx = jnp.min(cand, axis=1, keepdims=True)              # (P, 1) first max
        k_sel = idx >> n_shift
        n_sel = idx & (n_patch - 1)
        valid = valid & (k_of != k_sel) & (n_of != n_sel)
        acc = acc + best

    # lane-dense output: one full-vreg unmasked store, wrapper reads column 0.
    act_ref[...] = jnp.broadcast_to(acc, act_ref.shape)


@jax.jit
def _ppnet_adv_forward(x, img, mask, w_embed, protos):
    # The torch wrapper only consumes max_activation[0] -> process batch 0 only.
    xp = _patchify(x[0])
    ip = _patchify(img[0])
    mp = _patchify(mask[0])
    xim = jnp.stack([xp, ip, mp], axis=0)                       # (3, N, CPP): 1 DMA
    protos_kp = jnp.transpose(protos, (1, 0, 2)).reshape(K * P, D)  # k-major rows

    kernel = functools.partial(_ppnet_adv_kernel,
                               n_patch=N_PATCH, n_proto=P, n_sub=K)
    vmem = pl.BlockSpec(memory_space=pltpu.MemorySpace.VMEM)
    acts_wide = pl.pallas_call(
        kernel,
        out_shape=jax.ShapeDtypeStruct((P, 128), jnp.float32),  # lane-dense
        in_specs=[vmem, vmem, vmem],
        out_specs=vmem,
    )(xim, w_embed, protos_kp)

    acts = acts_wide[:, 0]                                      # (P,)
    mean = jnp.mean(acts).reshape(1, 1)                         # free in XLA
    return mean, acts


# ------------------------------ python-side wrapper -----------------------------
class PPNetAdversarialWrapper:
    """Mirror of the PyTorch wrapper's forward semantics."""

    def __init__(self, params, img, proto_nums, mask):
        self.params = params            # {'w_embed': (CPP, D), 'protos': (P, K, D)}
        self.img = img                  # (1, C, H, W)
        self.mask = mask                # (1, C, H, W) binary
        self.proto_nums = proto_nums    # kept for API parity
        self.initial_activation = None
        self.final_activation = None

    def __call__(self, x):
        mean, acts = _ppnet_adv_forward(
            x, self.img, self.mask,
            self.params["w_embed"], self.params["protos"])
        acts_np = np.asarray(acts)
        self.final_activation = acts_np
        if self.initial_activation is None:
            self.initial_activation = acts_np
        return mean   # shape (1, 1) == torch.mean(max_activation[0])[None, None]


# ----------------------------- pure numpy reference -----------------------------
def _bf16_round(a):
    """Round to bf16 (RNE) and back to f32/f64 — mirrors the kernel's MXU operand cast."""
    return np.asarray(jnp.asarray(np.asarray(a), jnp.bfloat16).astype(jnp.float32),
                      dtype=np.float64)


def _reference(x, img, mask, w_embed, protos):
    x2 = x * mask + img * (1.0 - mask)
    xp = np.asarray(_patchify(jnp.asarray(x2[0], jnp.float32)), dtype=np.float64)
    f = _bf16_round(xp) @ _bf16_round(w_embed)
    f = f / np.sqrt((f * f).sum(-1, keepdims=True) + _EPS)
    pv = protos.reshape(P * K, D).astype(np.float64)
    pv = pv / np.sqrt((pv * pv).sum(-1, keepdims=True) + _EPS)
    sim = _bf16_round(pv) @ _bf16_round(f).T                           # (PK, N)
    acts = np.zeros(P, np.float64)
    for p in range(P):
        s = sim[p * K:(p + 1) * K, :]
        valid = np.ones_like(s, bool)
        acc = 0.0
        for _ in range(K):
            masked = np.where(valid, s, -1e30)
            kk, nn = np.unravel_index(np.argmax(masked), masked.shape)
            acc += masked[kk, nn]
            valid[kk, :] = False
            valid[:, nn] = False
        acts[p] = acc
    acts = acts.astype(np.float32)
    return np.float32(acts.mean()), acts


# -------------------------------------- main -------------------------------------
if __name__ == "__main__":
    key = jax.random.PRNGKey(0)
    k1, k2, k3, k4, k5 = jax.random.split(key, 5)

    x = jax.random.normal(k1, (1, C, H, W), jnp.float32)          # attacked input
    img = jax.random.normal(k2, (1, C, H, W), jnp.float32)        # original image
    mask = (jax.random.uniform(k3, (1, C, H, W)) > 0.5).astype(jnp.float32)
    w_embed = jax.random.normal(k4, (CPP, D), jnp.float32) * 0.1  # patch embedding
    protos = jax.random.normal(k5, (P, K, D), jnp.float32)        # sub-prototypes

    wrapper = PPNetAdversarialWrapper(
        {"w_embed": w_embed, "protos": protos},
        img=img, proto_nums=np.arange(P), mask=mask)

    out = wrapper(x)
    out = jax.block_until_ready(out)
    assert out.shape == (1, 1) and out.dtype == jnp.float32

    ref_mean, ref_acts = _reference(np.asarray(x), np.asarray(img), np.asarray(mask),
                                    np.asarray(w_embed), np.asarray(protos))
    # tolerance covers bf16 MXU-operand rounding (mirrored in the reference) plus
    # f32-vs-f64 normalization / accumulation differences.
    np.testing.assert_allclose(np.asarray(out)[0, 0], ref_mean, rtol=5e-3, atol=5e-3)
    np.testing.assert_allclose(wrapper.final_activation, ref_acts, rtol=5e-3, atol=5e-3)

    print("KERNEL_OK")
</pallas_src>

<mosaic_0001>
module attributes {stable_mosaic.version = 11 : i64} {
  func.func @_ppnet_adv_kernel(%arg0: memref<3x16x48xf32, #tpu.memory_space<vmem>>, %arg1: memref<48x32xf32, #tpu.memory_space<vmem>>, %arg2: memref<32x32xf32, #tpu.memory_space<vmem>>, %arg3: memref<8x128xf32, #tpu.memory_space<vmem>>) attributes {dimension_semantics = [], scalar_prefetch = 0 : i64, scratch_operands = 0 : i64, tpu.core_type = #tpu.core_type<tc>} {
    %c0 = arith.constant 0 : index
    %c0_0 = arith.constant 0 : index
    %c0_1 = arith.constant 0 : index
    %0 = vector.load %arg0[%c0, %c0_0, %c0_1] : memref<3x16x48xf32, #tpu.memory_space<vmem>>, vector<1x16x48xf32>
    %1 = vector.shape_cast %0 : vector<1x16x48xf32> to vector<16x48xf32>
    %c1 = arith.constant 1 : index
    %c0_2 = arith.constant 0 : index
    %c0_3 = arith.constant 0 : index
    %2 = vector.load %arg0[%c1, %c0_2, %c0_3] : memref<3x16x48xf32, #tpu.memory_space<vmem>>, vector<1x16x48xf32>
    %3 = vector.shape_cast %2 : vector<1x16x48xf32> to vector<16x48xf32>
    %c2 = arith.constant 2 : index
    %c0_4 = arith.constant 0 : index
    %c0_5 = arith.constant 0 : index
    %4 = vector.load %arg0[%c2, %c0_4, %c0_5] : memref<3x16x48xf32, #tpu.memory_space<vmem>>, vector<1x16x48xf32>
    %5 = vector.shape_cast %4 : vector<1x16x48xf32> to vector<16x48xf32>
    %6 = arith.mulf %1, %5 : vector<16x48xf32>
    %cst = arith.constant 1.000000e+00 : f32
    %7 = vector.broadcast %cst : f32 to vector<16x48xf32>
    %8 = arith.subf %7, %5 : vector<16x48xf32>
    %9 = arith.mulf %3, %8 : vector<16x48xf32>
    %10 = arith.addf %6, %9 : vector<16x48xf32>
    %11 = arith.truncf %10 : vector<16x48xf32> to vector<16x48xbf16>
    %c0_6 = arith.constant 0 : index
    %c0_7 = arith.constant 0 : index
    %12 = vector.load %arg1[%c0_6, %c0_7] : memref<48x32xf32, #tpu.memory_space<vmem>>, vector<48x32xf32>
    %13 = arith.truncf %12 : vector<48x32xf32> to vector<48x32xbf16>
    %cst_8 = arith.constant dense<0.000000e+00> : vector<16x32xf32>
    %14 = tpu.matmul %11, %13, %cst_8 {dimension_numbers = #tpu.dot_dimension_numbers<[1], [0], [0], [1], [0, 0, 1, 1], [], []>} : vector<16x48xbf16>, vector<48x32xbf16>, vector<16x32xf32> -> vector<16x32xf32>
    %15 = arith.mulf %14, %14 : vector<16x32xf32>
    %cst_9 = arith.constant dense<0.000000e+00> : vector<16xf32>
    %16 = vector.multi_reduction <add>, %15, %cst_9 [1] : vector<16x32xf32> to vector<16xf32>
    %17 = vector.shape_cast %16 : vector<16xf32> to vector<16x1xf32>
    %cst_10 = arith.constant 9.99999997E-7 : f32
    %18 = vector.broadcast %cst_10 : f32 to vector<16x1xf32>
    %19 = arith.addf %17, %18 : vector<16x1xf32>
    %20 = math.rsqrt %19 : vector<16x1xf32>
    %21 = vector.broadcast %20 : vector<16x1xf32> to vector<16x32xf32>
    %22 = arith.mulf %14, %21 : vector<16x32xf32>
    %c0_11 = arith.constant 0 : index
    %c0_12 = arith.constant 0 : index
    %23 = vector.load %arg2[%c0_11, %c0_12] : memref<32x32xf32, #tpu.memory_space<vmem>>, vector<32x32xf32>
    %24 = arith.mulf %23, %23 : vector<32x32xf32>
    %cst_13 = arith.constant dense<0.000000e+00> : vector<32xf32>
    %25 = vector.multi_reduction <add>, %24, %cst_13 [1] : vector<32x32xf32> to vector<32xf32>
    %26 = vector.shape_cast %25 : vector<32xf32> to vector<32x1xf32>
    %cst_14 = arith.constant 9.99999997E-7 : f32
    %27 = vector.broadcast %cst_14 : f32 to vector<32x1xf32>
    %28 = arith.addf %26, %27 : vector<32x1xf32>
    %29 = math.rsqrt %28 : vector<32x1xf32>
    %30 = vector.broadcast %29 : vector<32x1xf32> to vector<32x32xf32>
    %31 = arith.mulf %23, %30 : vector<32x32xf32>
    %32 = arith.truncf %31 : vector<32x32xf32> to vector<32x32xbf16>
    %33 = arith.truncf %22 : vector<16x32xf32> to vector<16x32xbf16>
    %cst_15 = arith.constant dense<0.000000e+00> : vector<32x16xf32>
    %34 = tpu.matmul %32, %33, %cst_15 {dimension_numbers = #tpu.dot_dimension_numbers<[1], [1], [0], [0], [0, 0, 1, 0], [], []>} : vector<32x32xbf16>, vector<16x32xbf16>, vector<32x16xf32> -> vector<32x16xf32>
    %35 = vector.extract_strided_slice %34 {offsets = [0, 0], sizes = [8, 16], strides = [1, 1]} : vector<32x16xf32> to vector<8x16xf32>
    %36 = vector.extract_strided_slice %34 {offsets = [8, 0], sizes = [8, 16], strides = [1, 1]} : vector<32x16xf32> to vector<8x16xf32>
    %37 = vector.extract_strided_slice %34 {offsets = [16, 0], sizes = [8, 16], strides = [1, 1]} : vector<32x16xf32> to vector<8x16xf32>
    %38 = vector.extract_strided_slice %34 {offsets = [24, 0], sizes = [8, 16], strides = [1, 1]} : vector<32x16xf32> to vector<8x16xf32>
    %39 = tpu.concatenate %35, %36, %37, %38 in 1 : vector<8x16xf32>, vector<8x16xf32>, vector<8x16xf32>, vector<8x16xf32> -> vector<8x64xf32>
    %40 = tpu.iota {dimensions = array<i32: 1>} : vector<8x64xi32>
    %c4_i32 = arith.constant 4 : i32
    %41 = vector.broadcast %c4_i32 : i32 to vector<8x64xi32>
    %42 = arith.shrsi %40, %41 : vector<8x64xi32>
    %c15_i32 = arith.constant 15 : i32
    %43 = vector.broadcast %c15_i32 : i32 to vector<8x64xi32>
    %44 = arith.andi %40, %43 : vector<8x64xi32>
    %true = arith.constant true
    %45 = vector.broadcast %true : i1 to vector<8x64xi1>
    %cst_16 = arith.constant 0.000000e+00 : f32
    %46 = vector.broadcast %cst_16 : f32 to vector<8x1xf32>
    %cst_17 = arith.constant -1.000000e+30 : f32
    %47 = vector.broadcast %cst_17 : f32 to vector<8x64xf32>
    %48 = arith.select %45, %39, %47 : vector<8x64xi1>, vector<8x64xf32>
    %cst_18 = arith.constant dense<0xFF800000> : vector<8xf32>
    %49 = vector.multi_reduction <maximumf>, %48, %cst_18 [1] : vector<8x64xf32> to vector<8xf32>
    %50 = vector.shape_cast %49 : vector<8xf32> to vector<8x1xf32>
    %51 = vector.broadcast %50 : vector<8x1xf32> to vector<8x64xf32>
    %52 = arith.cmpf oge, %48, %51 : vector<8x64xf32>
    %c64_i32 = arith.constant 64 : i32
    %53 = vector.broadcast %c64_i32 : i32 to vector<8x64xi32>
    %54 = arith.select %52, %40, %53 : vector<8x64xi1>, vector<8x64xi32>
    %cst_19 = arith.constant dense<2147483647> : vector<8xi32>
    %55 = vector.multi_reduction <minsi>, %54, %cst_19 [1] : vector<8x64xi32> to vector<8xi32>
    %56 = vector.shape_cast %55 : vector<8xi32> to vector<8x1xi32>
    %c4_i32_20 = arith.constant 4 : i32
    %57 = vector.broadcast %c4_i32_20 : i32 to vector<8x1xi32>
    %58 = arith.shrsi %56, %57 : vector<8x1xi32>
    %c15_i32_21 = arith.constant 15 : i32
    %59 = vector.broadcast %c15_i32_21 : i32 to vector<8x1xi32>
    %60 = arith.andi %56, %59 : vector<8x1xi32>
    %61 = vector.broadcast %58 : vector<8x1xi32> to vector<8x64xi32>
    %62 = arith.cmpi ne, %42, %61 : vector<8x64xi32>
    %63 = arith.andi %45, %62 : vector<8x64xi1>
    %64 = vector.broadcast %60 : vector<8x1xi32> to vector<8x64xi32>
    %65 = arith.cmpi ne, %44, %64 : vector<8x64xi32>
    %66 = arith.andi %63, %65 : vector<8x64xi1>
    %67 = arith.addf %46, %50 : vector<8x1xf32>
    %cst_22 = arith.constant -1.000000e+30 : f32
    %68 = vector.broadcast %cst_22 : f32 to vector<8x64xf32>
    %69 = arith.select %66, %39, %68 : vector<8x64xi1>, vector<8x64xf32>
    %cst_23 = arith.constant dense<0xFF800000> : vector<8xf32>
    %70 = vector.multi_reduction <maximumf>, %69, %cst_23 [1] : vector<8x64xf32> to vector<8xf32>
    %71 = vector.shape_cast %70 : vector<8xf32> to vector<8x1xf32>
    %72 = vector.broadcast %71 : vector<8x1xf32> to vector<8x64xf32>
    %73 = arith.cmpf oge, %69, %72 : vector<8x64xf32>
    %c64_i32_24 = arith.constant 64 : i32
    %74 = vector.broadcast %c64_i32_24 : i32 to vector<8x64xi32>
    %75 = arith.select %73, %40, %74 : vector<8x64xi1>, vector<8x64xi32>
    %cst_25 = arith.constant dense<2147483647> : vector<8xi32>
    %76 = vector.multi_reduction <minsi>, %75, %cst_25 [1] : vector<8x64xi32> to vector<8xi32>
    %77 = vector.shape_cast %76 : vector<8xi32> to vector<8x1xi32>
    %c4_i32_26 = arith.constant 4 : i32
    %78 = vector.broadcast %c4_i32_26 : i32 to vector<8x1xi32>
    %79 = arith.shrsi %77, %78 : vector<8x1xi32>
    %c15_i32_27 = arith.constant 15 : i32
    %80 = vector.broadcast %c15_i32_27 : i32 to vector<8x1xi32>
    %81 = arith.andi %77, %80 : vector<8x1xi32>
    %82 = vector.broadcast %79 : vector<8x1xi32> to vector<8x64xi32>
    %83 = arith.cmpi ne, %42, %82 : vector<8x64xi32>
    %84 = arith.andi %66, %83 : vector<8x64xi1>
    %85 = vector.broadcast %81 : vector<8x1xi32> to vector<8x64xi32>
    %86 = arith.cmpi ne, %44, %85 : vector<8x64xi32>
    %87 = arith.andi %84, %86 : vector<8x64xi1>
    %88 = arith.addf %67, %71 : vector<8x1xf32>
    %cst_28 = arith.constant -1.000000e+30 : f32
    %89 = vector.broadcast %cst_28 : f32 to vector<8x64xf32>
    %90 = arith.select %87, %39, %89 : vector<8x64xi1>, vector<8x64xf32>
    %cst_29 = arith.constant dense<0xFF800000> : vector<8xf32>
    %91 = vector.multi_reduction <maximumf>, %90, %cst_29 [1] : vector<8x64xf32> to vector<8xf32>
    %92 = vector.shape_cast %91 : vector<8xf32> to vector<8x1xf32>
    %93 = vector.broadcast %92 : vector<8x1xf32> to vector<8x64xf32>
    %94 = arith.cmpf oge, %90, %93 : vector<8x64xf32>
    %c64_i32_30 = arith.constant 64 : i32
    %95 = vector.broadcast %c64_i32_30 : i32 to vector<8x64xi32>
    %96 = arith.select %94, %40, %95 : vector<8x64xi1>, vector<8x64xi32>
    %cst_31 = arith.constant dense<2147483647> : vector<8xi32>
    %97 = vector.multi_reduction <minsi>, %96, %cst_31 [1] : vector<8x64xi32> to vector<8xi32>
    %98 = vector.shape_cast %97 : vector<8xi32> to vector<8x1xi32>
    %c4_i32_32 = arith.constant 4 : i32
    %99 = vector.broadcast %c4_i32_32 : i32 to vector<8x1xi32>
    %100 = arith.shrsi %98, %99 : vector<8x1xi32>
    %c15_i32_33 = arith.constant 15 : i32
    %101 = vector.broadcast %c15_i32_33 : i32 to vector<8x1xi32>
    %102 = arith.andi %98, %101 : vector<8x1xi32>
    %103 = vector.broadcast %100 : vector<8x1xi32> to vector<8x64xi32>
    %104 = arith.cmpi ne, %42, %103 : vector<8x64xi32>
    %105 = arith.andi %87, %104 : vector<8x64xi1>
    %106 = vector.broadcast %102 : vector<8x1xi32> to vector<8x64xi32>
    %107 = arith.cmpi ne, %44, %106 : vector<8x64xi32>
    %108 = arith.andi %105, %107 : vector<8x64xi1>
    %109 = arith.addf %88, %92 : vector<8x1xf32>
    %cst_34 = arith.constant -1.000000e+30 : f32
    %110 = vector.broadcast %cst_34 : f32 to vector<8x64xf32>
    %111 = arith.select %108, %39, %110 : vector<8x64xi1>, vector<8x64xf32>
    %cst_35 = arith.constant dense<0xFF800000> : vector<8xf32>
    %112 = vector.multi_reduction <maximumf>, %111, %cst_35 [1] : vector<8x64xf32> to vector<8xf32>
    %113 = vector.shape_cast %112 : vector<8xf32> to vector<8x1xf32>
    %114 = arith.addf %109, %113 : vector<8x1xf32>
    %115 = vector.shape_cast %114 : vector<8x1xf32> to vector<8x1xf32>
    %116 = vector.broadcast %115 : vector<8x1xf32> to vector<8x128xf32>
    %c0_36 = arith.constant 0 : index
    %c0_37 = arith.constant 0 : index
    %117 = vector.load %arg3[%c0_36, %c0_37] : memref<8x128xf32, #tpu.memory_space<vmem>>, vector<8x128xf32>
    tpu.vector_store %arg3[%c0_36, %c0_37], %116 {strides = array<i32>} : memref<8x128xf32, #tpu.memory_space<vmem>>, vector<8x128xf32>,
    return
  }
}

</mosaic_0001>

<llo_original>
// kernel: squeeze.4
$region0: #{squeeze.4}
  %s0 = inlined_call_operand.hbm [shape: f32[1,3,16,16], index: 0, kind: input, shape index: {}]
  %s1 = inlined_call_operand.vmem [shape: f32[3,4,4,4,4], index: 1, kind: output, shape index: {}]
  $region1: #{squeeze.4} parent=0
    #allocation0 [shape = 'u8[24576]{0}', space=vmem, size = 0x6000, scoped, tag = 'operand span for operand 0']
    #allocation1 [shape = 's32[1]{0}', space=sflag, size = 0x4, scoped, tag = 'scoped memory for squeeze.4']
    #allocation2 [shape = 'u8[196608]{0}', space=vmem, size = 0x30000, scoped, tag = 'scoped mem for output reshape']
    %2 = vsyncpa [#allocation1], 0
    %s4 = ssub.s32 768, 768
    %5 = vsyncadd [#allocation1], %s4
    %s7 = sshll.u32 [#allocation0], 4
    %s8 = int_to_ptr.vmem [resolvable:$true] %s7
    %10 = dma.hbm_to_vmem [thread:$0]  %s0, 768, %s8, [#allocation1]
    %11 = dma.done [#allocation1], 768
    %v12 = vld [vmem:[#allocation0] sm:$0xff]
    %vm13 = vcmask 31744
    %14 = vst.msk [vmem:[#allocation2] ss:$8 sm:$0xf] %vm13, %v12
    %15 = vst.msk [vmem:[#allocation2] ss:$8 sm:$0xf0] %vm13, %v12
    %s16 = scalar_lea.vmem [#allocation0], 8
    %v17 = vld [vmem:[%s16] sm:$0xff]
    %vm18 = vcmask 31744
    %s19 = scalar_lea.vmem [#allocation2], 64
    %20 = vst.msk [vmem:[%s19] ss:$8 sm:$0xf] %vm18, %v17
    %s21 = scalar_lea.vmem [#allocation2], 64
    %22 = vst.msk [vmem:[%s21] ss:$8 sm:$0xf0] %vm18, %v17
    %s23 = scalar_lea.vmem [#allocation0], 16
    %v24 = vld [vmem:[%s23] sm:$0xff]
    %vm25 = vcmask 31744
    %s26 = scalar_lea.vmem [#allocation2], 128
    %27 = vst.msk [vmem:[%s26] ss:$8 sm:$0xf] %vm25, %v24
    %s28 = scalar_lea.vmem [#allocation2], 128
    %29 = vst.msk [vmem:[%s28] ss:$8 sm:$0xf0] %vm25, %v24
    %s30 = scalar_lea.vmem [#allocation0], 24
    %v31 = vld [vmem:[%s30] sm:$0xff]
    %vm32 = vcmask 31744
    %s33 = scalar_lea.vmem [#allocation2], 192
    %34 = vst.msk [vmem:[%s33] ss:$8 sm:$0xf] %vm32, %v31
    %s35 = scalar_lea.vmem [#allocation2], 192
    %36 = vst.msk [vmem:[%s35] ss:$8 sm:$0xf0] %vm32, %v31
    %s37 = scalar_lea.vmem [#allocation0], 32
    %v38 = vld [vmem:[%s37] sm:$0xff]
    %vm39 = vcmask 31744
    %s40 = scalar_lea.vmem [#allocation2], 256
    %41 = vst.msk [vmem:[%s40] ss:$8 sm:$0xf] %vm39, %v38
    %s42 = scalar_lea.vmem [#allocation2], 256
    %43 = vst.msk [vmem:[%s42] ss:$8 sm:$0xf0] %vm39, %v38
    %s44 = scalar_lea.vmem [#allocation0], 40
    %v45 = vld [vmem:[%s44] sm:$0xff]
    %vm46 = vcmask 31744
    %s47 = scalar_lea.vmem [#allocation2], 320
    %48 = vst.msk [vmem:[%s47] ss:$8 sm:$0xf] %vm46, %v45
    %s49 = scalar_lea.vmem [#allocation2], 320
    %50 = vst.msk [vmem:[%s49] ss:$8 sm:$0xf0] %vm46, %v45
    %v51 = vld [vmem:[#allocation0] sm:$0xff]
    %52 = vrot.lane.b32.xlu0 %v51, 124
    %v53 = vpop.permute.xlu0 %52
    %vm54 = vcmask 31744
    %s55 = scalar_lea.vmem [#allocation2], 1
    %56 = vst.msk [vmem:[%s55] ss:$8 sm:$0xf] %vm54, %v53
    %s57 = scalar_lea.vmem [#allocation2], 1
    %58 = vst.msk [vmem:[%s57] ss:$8 sm:$0xf0] %vm54, %v53
    %s59 = scalar_lea.vmem [#allocation0], 8
    %v60 = vld [vmem:[%s59] sm:$0xff]
    %61 = vrot.lane.b32.xlu0 %v60, 124
    %v62 = vpop.permute.xlu0 %61
    %vm63 = vcmask 31744
    %s64 = scalar_lea.vmem [#allocation2], 65
    %65 = vst.msk [vmem:[%s64] ss:$8 sm:$0xf] %vm63, %v62
    %s66 = scalar_lea.vmem [#allocation2], 65
    %67 = vst.msk [vmem:[%s66] ss:$8 sm:$0xf0] %vm63, %v62
    %s68 = scalar_lea.vmem [#allocation0], 16
    %v69 = vld [vmem:[%s68] sm:$0xff]
    %70 = vrot.lane.b32.xlu0 %v69, 124
    %v71 = vpop.permute.xlu0 %70
    %vm72 = vcmask 31744
    %s73 = scalar_lea.vmem [#allocation2], 129
    %74 = vst.msk [vmem:[%s73] ss:$8 sm:$0xf] %vm72, %v71
    %s75 = scalar_lea.vmem [#allocation2], 129
    %76 = vst.msk [vmem:[%s75] ss:$8 sm:$0xf0] %vm72, %v71
    %s77 = scalar_lea.vmem [#allocation0], 24
    %v78 = vld [vmem:[%s77] sm:$0xff]
    %79 = vrot.lane.b32.xlu0 %v78, 124
    %v80 = vpop.permute.xlu0 %79
    %vm81 = vcmask 31744
    %s82 = scalar_lea.vmem [#allocation2], 193
    %83 = vst.msk [vmem:[%s82] ss:$8 sm:$0xf] %vm81, %v80
    %s84 = scalar_lea.vmem [#allocation2], 193
    %85 = vst.msk [vmem:[%s84] ss:$8 sm:$0xf0] %vm81, %v80
    %s86 = scalar_lea.vmem [#allocation0], 32
    %v87 = vld [vmem:[%s86] sm:$0xff]
    %88 = vrot.lane.b32.xlu0 %v87, 124
    %v89 = vpop.permute.xlu0 %88
    %vm90 = vcmask 31744
    %s91 = scalar_lea.vmem [#allocation2], 257
    %92 = vst.msk [vmem:[%s91] ss:$8 sm:$0xf] %vm90, %v89
    %s93 = scalar_lea.vmem [#allocation2], 257
    %94 = vst.msk [vmem:[%s93] ss:$8 sm:$0xf0] %vm90, %v89
    %s95 = scalar_lea.vmem [#allocation0], 40
    %v96 = vld [vmem:[%s95] sm:$0xff]
    %97 = vrot.lane.b32.xlu0 %v96, 124
    %v98 = vpop.permute.xlu0 %97
    %vm99 = vcmask 31744
    %s100 = scalar_lea.vmem [#allocation2], 321
    %101 = vst.msk [vmem:[%s100] ss:$8 sm:$0xf] %vm99, %v98
    %s102 = scalar_lea.vmem [#allocation2], 321
    %103 = vst.msk [vmem:[%s102] ss:$8 sm:$0xf0] %vm99, %v98
    %v104 = vld [vmem:[#allocation0] sm:$0xff]
    %105 = vrot.lane.b32.xlu0 %v104, 120
    %v106 = vpop.permute.xlu0 %105
    %vm107 = vcmask 31744
    %s108 = scalar_lea.vmem [#allocation2], 2
    %109 = vst.msk [vmem:[%s108] ss:$8 sm:$0xf] %vm107, %v106
    %s110 = scalar_lea.vmem [#allocation2], 2
    %111 = vst.msk [vmem:[%s110] ss:$8 sm:$0xf0] %vm107, %v106
    %s112 = scalar_lea.vmem [#allocation0], 8
    %v113 = vld [vmem:[%s112] sm:$0xff]
    %114 = vrot.lane.b32.xlu0 %v113, 120
    %v115 = vpop.permute.xlu0 %114
    %vm116 = vcmask 31744
    %s117 = scalar_lea.vmem [#allocation2], 66
    %118 = vst.msk [vmem:[%s117] ss:$8 sm:$0xf] %vm116, %v115
    %s119 = scalar_lea.vmem [#allocation2], 66
    %120 = vst.msk [vmem:[%s119] ss:$8 sm:$0xf0] %vm116, %v115
    %s121 = scalar_lea.vmem [#allocation0], 16
    %v122 = vld [vmem:[%s121] sm:$0xff]
    %123 = vrot.lane.b32.xlu0 %v122, 120
    %v124 = vpop.permute.xlu0 %123
    %vm125 = vcmask 31744
    %s126 = scalar_lea.vmem [#allocation2], 130
    %127 = vst.msk [vmem:[%s126] ss:$8 sm:$0xf] %vm125, %v124
    %s128 = scalar_lea.vmem [#allocation2], 130
    %129 = vst.msk [vmem:[%s128] ss:$8 sm:$0xf0] %vm125, %v124
    %s130 = scalar_lea.vmem [#allocation0], 24
    %v131 = vld [vmem:[%s130] sm:$0xff]
    %132 = vrot.lane.b32.xlu0 %v131, 120
    %v133 = vpop.permute.xlu0 %132
    %vm134 = vcmask 31744
    %s135 = scalar_lea.vmem [#allocation2], 194
    %136 = vst.msk [vmem:[%s135] ss:$8 sm:$0xf] %vm134, %v133
    %s137 = scalar_lea.vmem [#allocation2], 194
    %138 = vst.msk [vmem:[%s137] ss:$8 sm:$0xf0] %vm134, %v133
    %s139 = scalar_lea.vmem [#allocation0], 32
    %v140 = vld [vmem:[%s139] sm:$0xff]
    %141 = vrot.lane.b32.xlu0 %v140, 120
    %v142 = vpop.permute.xlu0 %141
    %vm143 = vcmask 31744
    %s144 = scalar_lea.vmem [#allocation2], 258
    %145 = vst.msk [vmem:[%s144] ss:$8 sm:$0xf] %vm143, %v142
    %s146 = scalar_lea.vmem [#allocation2], 258
    %147 = vst.msk [vmem:[%s146] ss:$8 sm:$0xf0] %vm143, %v142
    %s148 = scalar_lea.vmem [#allocation0], 40
    %v149 = vld [vmem:[%s148] sm:$0xff]
    %150 = vrot.lane.b32.xlu0 %v149, 120
    %v151 = vpop.permute.xlu0 %150
    %vm152 = vcmask 31744
    %s153 = scalar_lea.vmem [#allocation2], 322
    %154 = vst.msk [vmem:[%s153] ss:$8 sm:$0xf] %vm152, %v151
    %s155 = scalar_lea.vmem [#allocation2], 322
    %156 = vst.msk [vmem:[%s155] ss:$8 sm:$0xf0] %vm152, %v151
    %v157 = vld [vmem:[#allocation0] sm:$0xff]
    %158 = vrot.lane.b32.xlu0 %v157, 116
    %v159 = vpop.permute.xlu0 %158
    %vm160 = vcmask 31744
    %s161 = scalar_lea.vmem [#allocation2], 3
    %162 = vst.msk [vmem:[%s161] ss:$8 sm:$0xf] %vm160, %v159
    %s163 = scalar_lea.vmem [#allocation2], 3
    %164 = vst.msk [vmem:[%s163] ss:$8 sm:$0xf0] %vm160, %v159
    %s165 = scalar_lea.vmem [#allocation0], 8
    %v166 = vld [vmem:[%s165] sm:$0xff]
    %167 = vrot.lane.b32.xlu0 %v166, 116
    %v168 = vpop.permute.xlu0 %167
    %vm169 = vcmask 31744
    %s170 = scalar_lea.vmem [#allocation2], 67
    %171 = vst.msk [vmem:[%s170] ss:$8 sm:$0xf] %vm169, %v168
    %s172 = scalar_lea.vmem [#allocation2], 67
    %173 = vst.msk [vmem:[%s172] ss:$8 sm:$0xf0] %vm169, %v168
    %s174 = scalar_lea.vmem [#allocation0], 16
    %v175 = vld [vmem:[%s174] sm:$0xff]
    %176 = vrot.lane.b32.xlu0 %v175, 116
    %v177 = vpop.permute.xlu0 %176
    %vm178 = vcmask 31744
    %s179 = scalar_lea.vmem [#allocation2], 131
    %180 = vst.msk [vmem:[%s179] ss:$8 sm:$0xf] %vm178, %v177
    %s181 = scalar_lea.vmem [#allocation2], 131
    %182 = vst.msk [vmem:[%s181] ss:$8 sm:$0xf0] %vm178, %v177
    %s183 = scalar_lea.vmem [#allocation0], 24
    %v184 = vld [vmem:[%s183] sm:$0xff]
    %185 = vrot.lane.b32.xlu0 %v184, 116
    %v186 = vpop.permute.xlu0 %185
    %vm187 = vcmask 31744
    %s188 = scalar_lea.vmem [#allocation2], 195
    %189 = vst.msk [vmem:[%s188] ss:$8 sm:$0xf] %vm187, %v186
    %s190 = scalar_lea.vmem [#allocation2], 195
    %191 = vst.msk [vmem:[%s190] ss:$8 sm:$0xf0] %vm187, %v186
    %s192 = scalar_lea.vmem [#allocation0], 32
    %v193 = vld [vmem:[%s192] sm:$0xff]
    %194 = vrot.lane.b32.xlu0 %v193, 116
    %v195 = vpop.permute.xlu0 %194
    %vm196 = vcmask 31744
    %s197 = scalar_lea.vmem [#allocation2], 259
    %198 = vst.msk [vmem:[%s197] ss:$8 sm:$0xf] %vm196, %v195
    %s199 = scalar_lea.vmem [#allocation2], 259
    %200 = vst.msk [vmem:[%s199] ss:$8 sm:$0xf0] %vm196, %v195
    %s201 = scalar_lea.vmem [#allocation0], 40
    %v202 = vld [vmem:[%s201] sm:$0xff]
    %203 = vrot.lane.b32.xlu0 %v202, 116
    %v204 = vpop.permute.xlu0 %203
    %vm205 = vcmask 31744
    %s206 = scalar_lea.vmem [#allocation2], 323
    %207 = vst.msk [vmem:[%s206] ss:$8 sm:$0xf] %vm205, %v204
    %s208 = scalar_lea.vmem [#allocation2], 323
    %209 = vst.msk [vmem:[%s208] ss:$8 sm:$0xf0] %vm205, %v204
    %s211 = sshll.u32 1, 4
    %s212 = ssub.s32 %s211, 1
    %v214 = vld [vmem:[#allocation2] sm:%s212]
    %s215 = sshll.u32 1, 4
    %s216 = ssub.s32 %s215, 1
    %217 = vst [vmem:[%s1] sm:%s216] %v214
    %s218 = scalar_lea.vmem [#allocation2], 8
    %v219 = vld [vmem:[%s218] sm:%s212]
    %s220 = sshll.u32 1, 4
    %s221 = ssub.s32 %s220, 1
    %s222 = scalar_lea.vmem %s1, 4
    %223 = vst [vmem:[%s222] sm:%s221] %v219
    %s224 = scalar_lea.vmem [#allocation2], 16
    %v225 = vld [vmem:[%s224] sm:%s212]
    %s226 = sshll.u32 1, 4
    %s227 = ssub.s32 %s226, 1
    %s228 = smul.addr 4, 2
    %s229 = scalar_lea.vmem %s1, %s228
    %230 = vst [vmem:[%s229] sm:%s227] %v225
    %s231 = scalar_lea.vmem [#allocation2], 24
    %v232 = vld [vmem:[%s231] sm:%s212]
    %s233 = sshll.u32 1, 4
    %s234 = ssub.s32 %s233, 1
    %s235 = smul.addr 4, 3
    %s236 = scalar_lea.vmem %s1, %s235
    %237 = vst [vmem:[%s236] sm:%s234] %v232
    %s238 = scalar_lea.vmem [#allocation2], 32
    %v239 = vld [vmem:[%s238] sm:%s212]
    %s240 = sshll.u32 1, 4
    %s241 = ssub.s32 %s240, 1
    %s242 = smul.addr 4, 4
    %s243 = scalar_lea.vmem %s1, %s242
    %244 = vst [vmem:[%s243] sm:%s241] %v239
    %s245 = scalar_lea.vmem [#allocation2], 40
    %v246 = vld [vmem:[%s245] sm:%s212]
    %s247 = sshll.u32 1, 4
    %s248 = ssub.s32 %s247, 1
    %s249 = smul.addr 4, 5
    %s250 = scalar_lea.vmem %s1, %s249
    %251 = vst [vmem:[%s250] sm:%s248] %v246
    %s252 = scalar_lea.vmem [#allocation2], 48
    %v253 = vld [vmem:[%s252] sm:%s212]
    %s254 = sshll.u32 1, 4
    %s255 = ssub.s32 %s254, 1
    %s256 = smul.addr 4, 6
    %s257 = scalar_lea.vmem %s1, %s256
    %258 = vst [vmem:[%s257] sm:%s255] %v253
    %s259 = scalar_lea.vmem [#allocation2], 56
    %v260 = vld [vmem:[%s259] sm:%s212]
    %s261 = sshll.u32 1, 4
    %s262 = ssub.s32 %s261, 1
    %s263 = smul.addr 4, 7
    %s264 = scalar_lea.vmem %s1, %s263
    %265 = vst [vmem:[%s264] sm:%s262] %v260
    %s266 = scalar_lea.vmem [#allocation2], 64
    %v267 = vld [vmem:[%s266] sm:%s212]
    %s268 = sshll.u32 1, 4
    %s269 = ssub.s32 %s268, 1
    %s270 = smul.addr 4, 8
    %s271 = scalar_lea.vmem %s1, %s270
    %272 = vst [vmem:[%s271] sm:%s269] %v267
    %s273 = scalar_lea.vmem [#allocation2], 72
    %v274 = vld [vmem:[%s273] sm:%s212]
    %s275 = sshll.u32 1, 4
    %s276 = ssub.s32 %s275, 1
    %s277 = smul.addr 4, 9
    %s278 = scalar_lea.vmem %s1, %s277
    %279 = vst [vmem:[%s278] sm:%s276] %v274
    %s280 = scalar_lea.vmem [#allocation2], 80
    %v281 = vld [vmem:[%s280] sm:%s212]
    %s282 = sshll.u32 1, 4
    %s283 = ssub.s32 %s282, 1
    %s284 = smul.addr 4, 10
    %s285 = scalar_lea.vmem %s1, %s284
    %286 = vst [vmem:[%s285] sm:%s283] %v281
    %s287 = scalar_lea.vmem [#allocation2], 88
    %v288 = vld [vmem:[%s287] sm:%s212]
    %s289 = sshll.u32 1, 4
    %s290 = ssub.s32 %s289, 1
    %s291 = smul.addr 4, 11
    %s292 = scalar_lea.vmem %s1, %s291
    %293 = vst [vmem:[%s292] sm:%s290] %v288
    %s294 = scalar_lea.vmem [#allocation2], 96
    %v295 = vld [vmem:[%s294] sm:%s212]
    %s296 = sshll.u32 1, 4
    %s297 = ssub.s32 %s296, 1
    %s298 = smul.addr 4, 12
    %s299 = scalar_lea.vmem %s1, %s298
    %300 = vst [vmem:[%s299] sm:%s297] %v295
    %s301 = scalar_lea.vmem [#allocation2], 104
    %v302 = vld [vmem:[%s301] sm:%s212]
    %s303 = sshll.u32 1, 4
    %s304 = ssub.s32 %s303, 1
    %s305 = smul.addr 4, 13
    %s306 = scalar_lea.vmem %s1, %s305
    %307 = vst [vmem:[%s306] sm:%s304] %v302
    %s308 = scalar_lea.vmem [#allocation2], 112
    %v309 = vld [vmem:[%s308] sm:%s212]
    %s310 = sshll.u32 1, 4
    %s311 = ssub.s32 %s310, 1
    %s312 = smul.addr 4, 14
    %s313 = scalar_lea.vmem %s1, %s312
    %314 = vst [vmem:[%s313] sm:%s311] %v309
    %s315 = scalar_lea.vmem [#allocation2], 120
    %v316 = vld [vmem:[%s315] sm:%s212]
    %s317 = sshll.u32 1, 4
    %s318 = ssub.s32 %s317, 1
    %s319 = smul.addr 4, 15
    %s320 = scalar_lea.vmem %s1, %s319
    %321 = vst [vmem:[%s320] sm:%s318] %v316
    %s322 = scalar_lea.vmem [#allocation2], 128
    %v323 = vld [vmem:[%s322] sm:%s212]
    %s324 = sshll.u32 1, 4
    %s325 = ssub.s32 %s324, 1
    %s326 = smul.addr 4, 16
    %s327 = scalar_lea.vmem %s1, %s326
    %328 = vst [vmem:[%s327] sm:%s325] %v323
    %s329 = scalar_lea.vmem [#allocation2], 136
    %v330 = vld [vmem:[%s329] sm:%s212]
    %s331 = sshll.u32 1, 4
    %s332 = ssub.s32 %s331, 1
    %s333 = smul.addr 4, 17
    %s334 = scalar_lea.vmem %s1, %s333
    %335 = vst [vmem:[%s334] sm:%s332] %v330
    %s336 = scalar_lea.vmem [#allocation2], 144
    %v337 = vld [vmem:[%s336] sm:%s212]
    %s338 = sshll.u32 1, 4
    %s339 = ssub.s32 %s338, 1
    %s340 = smul.addr 4, 18
    %s341 = scalar_lea.vmem %s1, %s340
    %342 = vst [vmem:[%s341] sm:%s339] %v337
    %s343 = scalar_lea.vmem [#allocation2], 152
    %v344 = vld [vmem:[%s343] sm:%s212]
    %s345 = sshll.u32 1, 4
    %s346 = ssub.s32 %s345, 1
    %s347 = smul.addr 4, 19
    %s348 = scalar_lea.vmem %s1, %s347
    %349 = vst [vmem:[%s348] sm:%s346] %v344
    %s350 = scalar_lea.vmem [#allocation2], 160
    %v351 = vld [vmem:[%s350] sm:%s212]
    %s352 = sshll.u32 1, 4
    %s353 = ssub.s32 %s352, 1
    %s354 = smul.addr 4, 20
    %s355 = scalar_lea.vmem %s1, %s354
    %356 = vst [vmem:[%s355] sm:%s353] %v351
    %s357 = scalar_lea.vmem [#allocation2], 168
    %v358 = vld [vmem:[%s357] sm:%s212]
    %s359 = sshll.u32 1, 4
    %s360 = ssub.s32 %s359, 1
    %s361 = smul.addr 4, 21
    %s362 = scalar_lea.vmem %s1, %s361
    %363 = vst [vmem:[%s362] sm:%s360] %v358
    %s364 = scalar_lea.vmem [#allocation2], 176
    %v365 = vld [vmem:[%s364] sm:%s212]
    %s366 = sshll.u32 1, 4
    %s367 = ssub.s32 %s366, 1
    %s368 = smul.addr 4, 22
    %s369 = scalar_lea.vmem %s1, %s368
    %370 = vst [vmem:[%s369] sm:%s367] %v365
    %s371 = scalar_lea.vmem [#allocation2], 184
    %v372 = vld [vmem:[%s371] sm:%s212]
    %s373 = sshll.u32 1, 4
    %s374 = ssub.s32 %s373, 1
    %s375 = smul.addr 4, 23
    %s376 = scalar_lea.vmem %s1, %s375
    %377 = vst [vmem:[%s376] sm:%s374] %v372
    %s378 = scalar_lea.vmem [#allocation2], 192
    %v379 = vld [vmem:[%s378] sm:%s212]
    %s380 = sshll.u32 1, 4
    %s381 = ssub.s32 %s380, 1
    %s382 = smul.addr 4, 24
    %s383 = scalar_lea.vmem %s1, %s382
    %384 = vst [vmem:[%s383] sm:%s381] %v379
    %s385 = scalar_lea.vmem [#allocation2], 200
    %v386 = vld [vmem:[%s385] sm:%s212]
    %s387 = sshll.u32 1, 4
    %s388 = ssub.s32 %s387, 1
    %s389 = smul.addr 4, 25
    %s390 = scalar_lea.vmem %s1, %s389
    %391 = vst [vmem:[%s390] sm:%s388] %v386
    %s392 = scalar_lea.vmem [#allocation2], 208
    %v393 = vld [vmem:[%s392] sm:%s212]
    %s394 = sshll.u32 1, 4
    %s395 = ssub.s32 %s394, 1
    %s396 = smul.addr 4, 26
    %s397 = scalar_lea.vmem %s1, %s396
    %398 = vst [vmem:[%s397] sm:%s395] %v393
    %s399 = scalar_lea.vmem [#allocation2], 216
    %v400 = vld [vmem:[%s399] sm:%s212]
    %s401 = sshll.u32 1, 4
    %s402 = ssub.s32 %s401, 1
    %s403 = smul.addr 4, 27
    %s404 = scalar_lea.vmem %s1, %s403
    %405 = vst [vmem:[%s404] sm:%s402] %v400
    %s406 = scalar_lea.vmem [#allocation2], 224
    %v407 = vld [vmem:[%s406] sm:%s212]
    %s408 = sshll.u32 1, 4
    %s409 = ssub.s32 %s408, 1
    %s410 = smul.addr 4, 28
    %s411 = scalar_lea.vmem %s1, %s410
    %412 = vst [vmem:[%s411] sm:%s409] %v407
    %s413 = scalar_lea.vmem [#allocation2], 232
    %v414 = vld [vmem:[%s413] sm:%s212]
    %s415 = sshll.u32 1, 4
    %s416 = ssub.s32 %s415, 1
    %s417 = smul.addr 4, 29
    %s418 = scalar_lea.vmem %s1, %s417
    %419 = vst [vmem:[%s418] sm:%s416] %v414
    %s420 = scalar_lea.vmem [#allocation2], 240
    %v421 = vld [vmem:[%s420] sm:%s212]
    %s422 = sshll.u32 1, 4
    %s423 = ssub.s32 %s422, 1
    %s424 = smul.addr 4, 30
    %s425 = scalar_lea.vmem %s1, %s424
    %426 = vst [vmem:[%s425] sm:%s423] %v421
    %s427 = scalar_lea.vmem [#allocation2], 248
    %v428 = vld [vmem:[%s427] sm:%s212]
    %s429 = sshll.u32 1, 4
    %s430 = ssub.s32 %s429, 1
    %s431 = smul.addr 4, 31
    %s432 = scalar_lea.vmem %s1, %s431
    %433 = vst [vmem:[%s432] sm:%s430] %v428
    %s434 = scalar_lea.vmem [#allocation2], 256
    %v435 = vld [vmem:[%s434] sm:%s212]
    %s436 = sshll.u32 1, 4
    %s437 = ssub.s32 %s436, 1
    %s438 = smul.addr 4, 32
    %s439 = scalar_lea.vmem %s1, %s438
    %440 = vst [vmem:[%s439] sm:%s437] %v435
    %s441 = scalar_lea.vmem [#allocation2], 264
    %v442 = vld [vmem:[%s441] sm:%s212]
    %s443 = sshll.u32 1, 4
    %s444 = ssub.s32 %s443, 1
    %s445 = smul.addr 4, 33
    %s446 = scalar_lea.vmem %s1, %s445
    %447 = vst [vmem:[%s446] sm:%s444] %v442
    %s448 = scalar_lea.vmem [#allocation2], 272
    %v449 = vld [vmem:[%s448] sm:%s212]
    %s450 = sshll.u32 1, 4
    %s451 = ssub.s32 %s450, 1
    %s452 = smul.addr 4, 34
    %s453 = scalar_lea.vmem %s1, %s452
    %454 = vst [vmem:[%s453] sm:%s451] %v449
    %s455 = scalar_lea.vmem [#allocation2], 280
    %v456 = vld [vmem:[%s455] sm:%s212]
    %s457 = sshll.u32 1, 4
    %s458 = ssub.s32 %s457, 1
    %s459 = smul.addr 4, 35
    %s460 = scalar_lea.vmem %s1, %s459
    %461 = vst [vmem:[%s460] sm:%s458] %v456
    %s462 = scalar_lea.vmem [#allocation2], 288
    %v463 = vld [vmem:[%s462] sm:%s212]
    %s464 = sshll.u32 1, 4
    %s465 = ssub.s32 %s464, 1
    %s466 = smul.addr 4, 36
    %s467 = scalar_lea.vmem %s1, %s466
    %468 = vst [vmem:[%s467] sm:%s465] %v463
    %s469 = scalar_lea.vmem [#allocation2], 296
    %v470 = vld [vmem:[%s469] sm:%s212]
    %s471 = sshll.u32 1, 4
    %s472 = ssub.s32 %s471, 1
    %s473 = smul.addr 4, 37
    %s474 = scalar_lea.vmem %s1, %s473
    %475 = vst [vmem:[%s474] sm:%s472] %v470
    %s476 = scalar_lea.vmem [#allocation2], 304
    %v477 = vld [vmem:[%s476] sm:%s212]
    %s478 = sshll.u32 1, 4
    %s479 = ssub.s32 %s478, 1
    %s480 = smul.addr 4, 38
    %s481 = scalar_lea.vmem %s1, %s480
    %482 = vst [vmem:[%s481] sm:%s479] %v477
    %s483 = scalar_lea.vmem [#allocation2], 312
    %v484 = vld [vmem:[%s483] sm:%s212]
    %s485 = sshll.u32 1, 4
    %s486 = ssub.s32 %s485, 1
    %s487 = smul.addr 4, 39
    %s488 = scalar_lea.vmem %s1, %s487
    %489 = vst [vmem:[%s488] sm:%s486] %v484
    %s490 = scalar_lea.vmem [#allocation2], 320
    %v491 = vld [vmem:[%s490] sm:%s212]
    %s492 = sshll.u32 1, 4
    %s493 = ssub.s32 %s492, 1
    %s494 = smul.addr 4, 40
    %s495 = scalar_lea.vmem %s1, %s494
    %496 = vst [vmem:[%s495] sm:%s493] %v491
    %s497 = scalar_lea.vmem [#allocation2], 328
    %v498 = vld [vmem:[%s497] sm:%s212]
    %s499 = sshll.u32 1, 4
    %s500 = ssub.s32 %s499, 1
    %s501 = smul.addr 4, 41
    %s502 = scalar_lea.vmem %s1, %s501
    %503 = vst [vmem:[%s502] sm:%s500] %v498
    %s504 = scalar_lea.vmem [#allocation2], 336
    %v505 = vld [vmem:[%s504] sm:%s212]
    %s506 = sshll.u32 1, 4
    %s507 = ssub.s32 %s506, 1
    %s508 = smul.addr 4, 42
    %s509 = scalar_lea.vmem %s1, %s508
    %510 = vst [vmem:[%s509] sm:%s507] %v505
    %s511 = scalar_lea.vmem [#allocation2], 344
    %v512 = vld [vmem:[%s511] sm:%s212]
    %s513 = sshll.u32 1, 4
    %s514 = ssub.s32 %s513, 1
    %s515 = smul.addr 4, 43
    %s516 = scalar_lea.vmem %s1, %s515
    %517 = vst [vmem:[%s516] sm:%s514] %v512
    %s518 = scalar_lea.vmem [#allocation2], 352
    %v519 = vld [vmem:[%s518] sm:%s212]
    %s520 = sshll.u32 1, 4
    %s521 = ssub.s32 %s520, 1
    %s522 = smul.addr 4, 44
    %s523 = scalar_lea.vmem %s1, %s522
    %524 = vst [vmem:[%s523] sm:%s521] %v519
    %s525 = scalar_lea.vmem [#allocation2], 360
    %v526 = vld [vmem:[%s525] sm:%s212]
    %s527 = sshll.u32 1, 4
    %s528 = ssub.s32 %s527, 1
    %s529 = smul.addr 4, 45
    %s530 = scalar_lea.vmem %s1, %s529
    %531 = vst [vmem:[%s530] sm:%s528] %v526
    %s532 = scalar_lea.vmem [#allocation2], 368
    %v533 = vld [vmem:[%s532] sm:%s212]
    %s534 = sshll.u32 1, 4
    %s535 = ssub.s32 %s534, 1
    %s536 = smul.addr 4, 46
    %s537 = scalar_lea.vmem %s1, %s536
    %538 = vst [vmem:[%s537] sm:%s535] %v533
    %s539 = scalar_lea.vmem [#allocation2], 376
    %v540 = vld [vmem:[%s539] sm:%s212]
    %s541 = sshll.u32 1, 4
    %s542 = ssub.s32 %s541, 1
    %s543 = smul.addr 4, 47
    %s544 = scalar_lea.vmem %s1, %s543
    %545 = vst [vmem:[%s544] sm:%s542] %v540
    %546 = vsyncpa [#allocation1], 1

// kernel: squeeze.5
$region0: #{squeeze.5}
  %s0 = inlined_call_operand.vmem [shape: f32[1,3,16,16], index: 0, kind: input, shape index: {}]
  %s1 = inlined_call_operand.vmem [shape: f32[3,4,4,4,4], index: 1, kind: output, shape index: {}]
  $region1: #{squeeze.5} parent=0
    #allocation0 [shape = 'u8[196608]{0}', space=vmem, size = 0x30000, scoped, tag = 'scoped mem for output reshape']
    %v2 = vld [vmem:[%s0] sm:$0xff]
    %vm3 = vcmask 31744
    %4 = vst.msk [vmem:[#allocation0] ss:$8 sm:$0xf] %vm3, %v2
    %5 = vst.msk [vmem:[#allocation0] ss:$8 sm:$0xf0] %vm3, %v2
    %s6 = scalar_lea.vmem %s0, 8
    %v7 = vld [vmem:[%s6] sm:$0xff]
    %vm8 = vcmask 31744
    %s9 = scalar_lea.vmem [#allocation0], 64
    %10 = vst.msk [vmem:[%s9] ss:$8 sm:$0xf] %vm8, %v7
    %s11 = scalar_lea.vmem [#allocation0], 64
    %12 = vst.msk [vmem:[%s11] ss:$8 sm:$0xf0] %vm8, %v7
    %s13 = scalar_lea.vmem %s0, 16
    %v14 = vld [vmem:[%s13] sm:$0xff]
    %vm15 = vcmask 31744
    %s16 = scalar_lea.vmem [#allocation0], 128
    %17 = vst.msk [vmem:[%s16] ss:$8 sm:$0xf] %vm15, %v14
    %s18 = scalar_lea.vmem [#allocation0], 128
    %19 = vst.msk [vmem:[%s18] ss:$8 sm:$0xf0] %vm15, %v14
    %s20 = scalar_lea.vmem %s0, 24
    %v21 = vld [vmem:[%s20] sm:$0xff]
    %vm22 = vcmask 31744
    %s23 = scalar_lea.vmem [#allocation0], 192
    %24 = vst.msk [vmem:[%s23] ss:$8 sm:$0xf] %vm22, %v21
    %s25 = scalar_lea.vmem [#allocation0], 192
    %26 = vst.msk [vmem:[%s25] ss:$8 sm:$0xf0] %vm22, %v21
    %s27 = scalar_lea.vmem %s0, 32
    %v28 = vld [vmem:[%s27] sm:$0xff]
    %vm29 = vcmask 31744
    %s30 = scalar_lea.vmem [#allocation0], 256
    %31 = vst.msk [vmem:[%s30] ss:$8 sm:$0xf] %vm29, %v28
    %s32 = scalar_lea.vmem [#allocation0], 256
    %33 = vst.msk [vmem:[%s32] ss:$8 sm:$0xf0] %vm29, %v28
    %s34 = scalar_lea.vmem %s0, 40
    %v35 = vld [vmem:[%s34] sm:$0xff]
    %vm36 = vcmask 31744
    %s37 = scalar_lea.vmem [#allocation0], 320
    %38 = vst.msk [vmem:[%s37] ss:$8 sm:$0xf] %vm36, %v35
    %s39 = scalar_lea.vmem [#allocation0], 320
    %40 = vst.msk [vmem:[%s39] ss:$8 sm:$0xf0] %vm36, %v35
    %v41 = vld [vmem:[%s0] sm:$0xff]
    %42 = vrot.lane.b32.xlu0 %v41, 124
    %v43 = vpop.permute.xlu0 %42
    %vm44 = vcmask 31744
    %s45 = scalar_lea.vmem [#allocation0], 1
    %46 = vst.msk [vmem:[%s45] ss:$8 sm:$0xf] %vm44, %v43
    %s47 = scalar_lea.vmem [#allocation0], 1
    %48 = vst.msk [vmem:[%s47] ss:$8 sm:$0xf0] %vm44, %v43
    %s49 = scalar_lea.vmem %s0, 8
    %v50 = vld [vmem:[%s49] sm:$0xff]
    %51 = vrot.lane.b32.xlu0 %v50, 124
    %v52 = vpop.permute.xlu0 %51
    %vm53 = vcmask 31744
    %s54 = scalar_lea.vmem [#allocation0], 65
    %55 = vst.msk [vmem:[%s54] ss:$8 sm:$0xf] %vm53, %v52
    %s56 = scalar_lea.vmem [#allocation0], 65
    %57 = vst.msk [vmem:[%s56] ss:$8 sm:$0xf0] %vm53, %v52
    %s58 = scalar_lea.vmem %s0, 16
    %v59 = vld [vmem:[%s58] sm:$0xff]
    %60 = vrot.lane.b32.xlu0 %v59, 124
    %v61 = vpop.permute.xlu0 %60
    %vm62 = vcmask 31744
    %s63 = scalar_lea.vmem [#allocation0], 129
    %64 = vst.msk [vmem:[%s63] ss:$8 sm:$0xf] %vm62, %v61
    %s65 = scalar_lea.vmem [#allocation0], 129
    %66 = vst.msk [vmem:[%s65] ss:$8 sm:$0xf0] %vm62, %v61
    %s67 = scalar_lea.vmem %s0, 24
    %v68 = vld [vmem:[%s67] sm:$0xff]
    %69 = vrot.lane.b32.xlu0 %v68, 124
    %v70 = vpop.permute.xlu0 %69
    %vm71 = vcmask 31744
    %s72 = scalar_lea.vmem [#allocation0], 193
    %73 = vst.msk [vmem:[%s72] ss:$8 sm:$0xf] %vm71, %v70
    %s74 = scalar_lea.vmem [#allocation0], 193
    %75 = vst.msk [vmem:[%s74] ss:$8 sm:$0xf0] %vm71, %v70
    %s76 = scalar_lea.vmem %s0, 32
    %v77 = vld [vmem:[%s76] sm:$0xff]
    %78 = vrot.lane.b32.xlu0 %v77, 124
    %v79 = vpop.permute.xlu0 %78
    %vm80 = vcmask 31744
    %s81 = scalar_lea.vmem [#allocation0], 257
    %82 = vst.msk [vmem:[%s81] ss:$8 sm:$0xf] %vm80, %v79
    %s83 = scalar_lea.vmem [#allocation0], 257
    %84 = vst.msk [vmem:[%s83] ss:$8 sm:$0xf0] %vm80, %v79
    %s85 = scalar_lea.vmem %s0, 40
    %v86 = vld [vmem:[%s85] sm:$0xff]
    %87 = vrot.lane.b32.xlu0 %v86, 124
    %v88 = vpop.permute.xlu0 %87
    %vm89 = vcmask 31744
    %s90 = scalar_lea.vmem [#allocation0], 321
    %91 = vst.msk [vmem:[%s90] ss:$8 sm:$0xf] %vm89, %v88
    %s92 = scalar_lea.vmem [#allocation0], 321
    %93 = vst.msk [vmem:[%s92] ss:$8 sm:$0xf0] %vm89, %v88
    %v94 = vld [vmem:[%s0] sm:$0xff]
    %95 = vrot.lane.b32.xlu0 %v94, 120
    %v96 = vpop.permute.xlu0 %95
    %vm97 = vcmask 31744
    %s98 = scalar_lea.vmem [#allocation0], 2
    %99 = vst.msk [vmem:[%s98] ss:$8 sm:$0xf] %vm97, %v96
    %s100 = scalar_lea.vmem [#allocation0], 2
    %101 = vst.msk [vmem:[%s100] ss:$8 sm:$0xf0] %vm97, %v96
    %s102 = scalar_lea.vmem %s0, 8
    %v103 = vld [vmem:[%s102] sm:$0xff]
    %104 = vrot.lane.b32.xlu0 %v103, 120
    %v105 = vpop.permute.xlu0 %104
    %vm106 = vcmask 31744
    %s107 = scalar_lea.vmem [#allocation0], 66
    %108 = vst.msk [vmem:[%s107] ss:$8 sm:$0xf] %vm106, %v105
    %s109 = scalar_lea.vmem [#allocation0], 66
    %110 = vst.msk [vmem:[%s109] ss:$8 sm:$0xf0] %vm106, %v105
    %s111 = scalar_lea.vmem %s0, 16
    %v112 = vld [vmem:[%s111] sm:$0xff]
    %113 = vrot.lane.b32.xlu0 %v112, 120
    %v114 = vpop.permute.xlu0 %113
    %vm115 = vcmask 31744
    %s116 = scalar_lea.vmem [#allocation0], 130
    %117 = vst.msk [vmem:[%s116] ss:$8 sm:$0xf] %vm115, %v114
    %s118 = scalar_lea.vmem [#allocation0], 130
    %119 = vst.msk [vmem:[%s118] ss:$8 sm:$0xf0] %vm115, %v114
    %s120 = scalar_lea.vmem %s0, 24
    %v121 = vld [vmem:[%s120] sm:$0xff]
    %122 = vrot.lane.b32.xlu0 %v121, 120
    %v123 = vpop.permute.xlu0 %122
    %vm124 = vcmask 31744
    %s125 = scalar_lea.vmem [#allocation0], 194
    %126 = vst.msk [vmem:[%s125] ss:$8 sm:$0xf] %vm124, %v123
    %s127 = scalar_lea.vmem [#allocation0], 194
    %128 = vst.msk [vmem:[%s127] ss:$8 sm:$0xf0] %vm124, %v123
    %s129 = scalar_lea.vmem %s0, 32
    %v130 = vld [vmem:[%s129] sm:$0xff]
    %131 = vrot.lane.b32.xlu0 %v130, 120
    %v132 = vpop.permute.xlu0 %131
    %vm133 = vcmask 31744
    %s134 = scalar_lea.vmem [#allocation0], 258
    %135 = vst.msk [vmem:[%s134] ss:$8 sm:$0xf] %vm133, %v132
    %s136 = scalar_lea.vmem [#allocation0], 258
    %137 = vst.msk [vmem:[%s136] ss:$8 sm:$0xf0] %vm133, %v132
    %s138 = scalar_lea.vmem %s0, 40
    %v139 = vld [vmem:[%s138] sm:$0xff]
    %140 = vrot.lane.b32.xlu0 %v139, 120
    %v141 = vpop.permute.xlu0 %140
    %vm142 = vcmask 31744
    %s143 = scalar_lea.vmem [#allocation0], 322
    %144 = vst.msk [vmem:[%s143] ss:$8 sm:$0xf] %vm142, %v141
    %s145 = scalar_lea.vmem [#allocation0], 322
    %146 = vst.msk [vmem:[%s145] ss:$8 sm:$0xf0] %vm142, %v141
    %v147 = vld [vmem:[%s0] sm:$0xff]
    %148 = vrot.lane.b32.xlu0 %v147, 116
    %v149 = vpop.permute.xlu0 %148
    %vm150 = vcmask 31744
    %s151 = scalar_lea.vmem [#allocation0], 3
    %152 = vst.msk [vmem:[%s151] ss:$8 sm:$0xf] %vm150, %v149
    %s153 = scalar_lea.vmem [#allocation0], 3
    %154 = vst.msk [vmem:[%s153] ss:$8 sm:$0xf0] %vm150, %v149
    %s155 = scalar_lea.vmem %s0, 8
    %v156 = vld [vmem:[%s155] sm:$0xff]
    %157 = vrot.lane.b32.xlu0 %v156, 116
    %v158 = vpop.permute.xlu0 %157
    %vm159 = vcmask 31744
    %s160 = scalar_lea.vmem [#allocation0], 67
    %161 = vst.msk [vmem:[%s160] ss:$8 sm:$0xf] %vm159, %v158
    %s162 = scalar_lea.vmem [#allocation0], 67
    %163 = vst.msk [vmem:[%s162] ss:$8 sm:$0xf0] %vm159, %v158
    %s164 = scalar_lea.vmem %s0, 16
    %v165 = vld [vmem:[%s164] sm:$0xff]
    %166 = vrot.lane.b32.xlu0 %v165, 116
    %v167 = vpop.permute.xlu0 %166
    %vm168 = vcmask 31744
    %s169 = scalar_lea.vmem [#allocation0], 131
    %170 = vst.msk [vmem:[%s169] ss:$8 sm:$0xf] %vm168, %v167
    %s171 = scalar_lea.vmem [#allocation0], 131
    %172 = vst.msk [vmem:[%s171] ss:$8 sm:$0xf0] %vm168, %v167
    %s173 = scalar_lea.vmem %s0, 24
    %v174 = vld [vmem:[%s173] sm:$0xff]
    %175 = vrot.lane.b32.xlu0 %v174, 116
    %v176 = vpop.permute.xlu0 %175
    %vm177 = vcmask 31744
    %s178 = scalar_lea.vmem [#allocation0], 195
    %179 = vst.msk [vmem:[%s178] ss:$8 sm:$0xf] %vm177, %v176
    %s180 = scalar_lea.vmem [#allocation0], 195
    %181 = vst.msk [vmem:[%s180] ss:$8 sm:$0xf0] %vm177, %v176
    %s182 = scalar_lea.vmem %s0, 32
    %v183 = vld [vmem:[%s182] sm:$0xff]
    %184 = vrot.lane.b32.xlu0 %v183, 116
    %v185 = vpop.permute.xlu0 %184
    %vm186 = vcmask 31744
    %s187 = scalar_lea.vmem [#allocation0], 259
    %188 = vst.msk [vmem:[%s187] ss:$8 sm:$0xf] %vm186, %v185
    %s189 = scalar_lea.vmem [#allocation0], 259
    %190 = vst.msk [vmem:[%s189] ss:$8 sm:$0xf0] %vm186, %v185
    %s191 = scalar_lea.vmem %s0, 40
    %v192 = vld [vmem:[%s191] sm:$0xff]
    %193 = vrot.lane.b32.xlu0 %v192, 116
    %v194 = vpop.permute.xlu0 %193
    %vm195 = vcmask 31744
    %s196 = scalar_lea.vmem [#allocation0], 323
    %197 = vst.msk [vmem:[%s196] ss:$8 sm:$0xf] %vm195, %v194
    %s198 = scalar_lea.vmem [#allocation0], 323
    %199 = vst.msk [vmem:[%s198] ss:$8 sm:$0xf0] %vm195, %v194
    %s201 = sshll.u32 1, 4
    %s202 = ssub.s32 %s201, 1
    %v204 = vld [vmem:[#allocation0] sm:%s202]
    %s205 = sshll.u32 1, 4
    %s206 = ssub.s32 %s205, 1
    %207 = vst [vmem:[%s1] sm:%s206] %v204
    %s208 = scalar_lea.vmem [#allocation0], 8
    %v209 = vld [vmem:[%s208] sm:%s202]
    %s210 = sshll.u32 1, 4
    %s211 = ssub.s32 %s210, 1
    %s212 = scalar_lea.vmem %s1, 4
    %213 = vst [vmem:[%s212] sm:%s211] %v209
    %s214 = scalar_lea.vmem [#allocation0], 16
    %v215 = vld [vmem:[%s214] sm:%s202]
    %s216 = sshll.u32 1, 4
    %s217 = ssub.s32 %s216, 1
    %s218 = smul.addr 4, 2
    %s219 = scalar_lea.vmem %s1, %s218
    %220 = vst [vmem:[%s219] sm:%s217] %v215
    %s221 = scalar_lea.vmem [#allocation0], 24
    %v222 = vld [vmem:[%s221] sm:%s202]
    %s223 = sshll.u32 1, 4
    %s224 = ssub.s32 %s223, 1
    %s225 = smul.addr 4, 3
    %s226 = scalar_lea.vmem %s1, %s225
    %227 = vst [vmem:[%s226] sm:%s224] %v222
    %s228 = scalar_lea.vmem [#allocation0], 32
    %v229 = vld [vmem:[%s228] sm:%s202]
    %s230 = sshll.u32 1, 4
    %s231 = ssub.s32 %s230, 1
    %s232 = smul.addr 4, 4
    %s233 = scalar_lea.vmem %s1, %s232
    %234 = vst [vmem:[%s233] sm:%s231] %v229
    %s235 = scalar_lea.vmem [#allocation0], 40
    %v236 = vld [vmem:[%s235] sm:%s202]
    %s237 = sshll.u32 1, 4
    %s238 = ssub.s32 %s237, 1
    %s239 = smul.addr 4, 5
    %s240 = scalar_lea.vmem %s1, %s239
    %241 = vst [vmem:[%s240] sm:%s238] %v236
    %s242 = scalar_lea.vmem [#allocation0], 48
    %v243 = vld [vmem:[%s242] sm:%s202]
    %s244 = sshll.u32 1, 4
    %s245 = ssub.s32 %s244, 1
    %s246 = smul.addr 4, 6
    %s247 = scalar_lea.vmem %s1, %s246
    %248 = vst [vmem:[%s247] sm:%s245] %v243
    %s249 = scalar_lea.vmem [#allocation0], 56
    %v250 = vld [vmem:[%s249] sm:%s202]
    %s251 = sshll.u32 1, 4
    %s252 = ssub.s32 %s251, 1
    %s253 = smul.addr 4, 7
    %s254 = scalar_lea.vmem %s1, %s253
    %255 = vst [vmem:[%s254] sm:%s252] %v250
    %s256 = scalar_lea.vmem [#allocation0], 64
    %v257 = vld [vmem:[%s256] sm:%s202]
    %s258 = sshll.u32 1, 4
    %s259 = ssub.s32 %s258, 1
    %s260 = smul.addr 4, 8
    %s261 = scalar_lea.vmem %s1, %s260
    %262 = vst [vmem:[%s261] sm:%s259] %v257
    %s263 = scalar_lea.vmem [#allocation0], 72
    %v264 = vld [vmem:[%s263] sm:%s202]
    %s265 = sshll.u32 1, 4
    %s266 = ssub.s32 %s265, 1
    %s267 = smul.addr 4, 9
    %s268 = scalar_lea.vmem %s1, %s267
    %269 = vst [vmem:[%s268] sm:%s266] %v264
    %s270 = scalar_lea.vmem [#allocation0], 80
    %v271 = vld [vmem:[%s270] sm:%s202]
    %s272 = sshll.u32 1, 4
    %s273 = ssub.s32 %s272, 1
    %s274 = smul.addr 4, 10
    %s275 = scalar_lea.vmem %s1, %s274
    %276 = vst [vmem:[%s275] sm:%s273] %v271
    %s277 = scalar_lea.vmem [#allocation0], 88
    %v278 = vld [vmem:[%s277] sm:%s202]
    %s279 = sshll.u32 1, 4
    %s280 = ssub.s32 %s279, 1
    %s281 = smul.addr 4, 11
    %s282 = scalar_lea.vmem %s1, %s281
    %283 = vst [vmem:[%s282] sm:%s280] %v278
    %s284 = scalar_lea.vmem [#allocation0], 96
    %v285 = vld [vmem:[%s284] sm:%s202]
    %s286 = sshll.u32 1, 4
    %s287 = ssub.s32 %s286, 1
    %s288 = smul.addr 4, 12
    %s289 = scalar_lea.vmem %s1, %s288
    %290 = vst [vmem:[%s289] sm:%s287] %v285
    %s291 = scalar_lea.vmem [#allocation0], 104
    %v292 = vld [vmem:[%s291] sm:%s202]
    %s293 = sshll.u32 1, 4
    %s294 = ssub.s32 %s293, 1
    %s295 = smul.addr 4, 13
    %s296 = scalar_lea.vmem %s1, %s295
    %297 = vst [vmem:[%s296] sm:%s294] %v292
    %s298 = scalar_lea.vmem [#allocation0], 112
    %v299 = vld [vmem:[%s298] sm:%s202]
    %s300 = sshll.u32 1, 4
    %s301 = ssub.s32 %s300, 1
    %s302 = smul.addr 4, 14
    %s303 = scalar_lea.vmem %s1, %s302
    %304 = vst [vmem:[%s303] sm:%s301] %v299
    %s305 = scalar_lea.vmem [#allocation0], 120
    %v306 = vld [vmem:[%s305] sm:%s202]
    %s307 = sshll.u32 1, 4
    %s308 = ssub.s32 %s307, 1
    %s309 = smul.addr 4, 15
    %s310 = scalar_lea.vmem %s1, %s309
    %311 = vst [vmem:[%s310] sm:%s308] %v306
    %s312 = scalar_lea.vmem [#allocation0], 128
    %v313 = vld [vmem:[%s312] sm:%s202]
    %s314 = sshll.u32 1, 4
    %s315 = ssub.s32 %s314, 1
    %s316 = smul.addr 4, 16
    %s317 = scalar_lea.vmem %s1, %s316
    %318 = vst [vmem:[%s317] sm:%s315] %v313
    %s319 = scalar_lea.vmem [#allocation0], 136
    %v320 = vld [vmem:[%s319] sm:%s202]
    %s321 = sshll.u32 1, 4
    %s322 = ssub.s32 %s321, 1
    %s323 = smul.addr 4, 17
    %s324 = scalar_lea.vmem %s1, %s323
    %325 = vst [vmem:[%s324] sm:%s322] %v320
    %s326 = scalar_lea.vmem [#allocation0], 144
    %v327 = vld [vmem:[%s326] sm:%s202]
    %s328 = sshll.u32 1, 4
    %s329 = ssub.s32 %s328, 1
    %s330 = smul.addr 4, 18
    %s331 = scalar_lea.vmem %s1, %s330
    %332 = vst [vmem:[%s331] sm:%s329] %v327
    %s333 = scalar_lea.vmem [#allocation0], 152
    %v334 = vld [vmem:[%s333] sm:%s202]
    %s335 = sshll.u32 1, 4
    %s336 = ssub.s32 %s335, 1
    %s337 = smul.addr 4, 19
    %s338 = scalar_lea.vmem %s1, %s337
    %339 = vst [vmem:[%s338] sm:%s336] %v334
    %s340 = scalar_lea.vmem [#allocation0], 160
    %v341 = vld [vmem:[%s340] sm:%s202]
    %s342 = sshll.u32 1, 4
    %s343 = ssub.s32 %s342, 1
    %s344 = smul.addr 4, 20
    %s345 = scalar_lea.vmem %s1, %s344
    %346 = vst [vmem:[%s345] sm:%s343] %v341
    %s347 = scalar_lea.vmem [#allocation0], 168
    %v348 = vld [vmem:[%s347] sm:%s202]
    %s349 = sshll.u32 1, 4
    %s350 = ssub.s32 %s349, 1
    %s351 = smul.addr 4, 21
    %s352 = scalar_lea.vmem %s1, %s351
    %353 = vst [vmem:[%s352] sm:%s350] %v348
    %s354 = scalar_lea.vmem [#allocation0], 176
    %v355 = vld [vmem:[%s354] sm:%s202]
    %s356 = sshll.u32 1, 4
    %s357 = ssub.s32 %s356, 1
    %s358 = smul.addr 4, 22
    %s359 = scalar_lea.vmem %s1, %s358
    %360 = vst [vmem:[%s359] sm:%s357] %v355
    %s361 = scalar_lea.vmem [#allocation0], 184
    %v362 = vld [vmem:[%s361] sm:%s202]
    %s363 = sshll.u32 1, 4
    %s364 = ssub.s32 %s363, 1
    %s365 = smul.addr 4, 23
    %s366 = scalar_lea.vmem %s1, %s365
    %367 = vst [vmem:[%s366] sm:%s364] %v362
    %s368 = scalar_lea.vmem [#allocation0], 192
    %v369 = vld [vmem:[%s368] sm:%s202]
    %s370 = sshll.u32 1, 4
    %s371 = ssub.s32 %s370, 1
    %s372 = smul.addr 4, 24
    %s373 = scalar_lea.vmem %s1, %s372
    %374 = vst [vmem:[%s373] sm:%s371] %v369
    %s375 = scalar_lea.vmem [#allocation0], 200
    %v376 = vld [vmem:[%s375] sm:%s202]
    %s377 = sshll.u32 1, 4
    %s378 = ssub.s32 %s377, 1
    %s379 = smul.addr 4, 25
    %s380 = scalar_lea.vmem %s1, %s379
    %381 = vst [vmem:[%s380] sm:%s378] %v376
    %s382 = scalar_lea.vmem [#allocation0], 208
    %v383 = vld [vmem:[%s382] sm:%s202]
    %s384 = sshll.u32 1, 4
    %s385 = ssub.s32 %s384, 1
    %s386 = smul.addr 4, 26
    %s387 = scalar_lea.vmem %s1, %s386
    %388 = vst [vmem:[%s387] sm:%s385] %v383
    %s389 = scalar_lea.vmem [#allocation0], 216
    %v390 = vld [vmem:[%s389] sm:%s202]
    %s391 = sshll.u32 1, 4
    %s392 = ssub.s32 %s391, 1
    %s393 = smul.addr 4, 27
    %s394 = scalar_lea.vmem %s1, %s393
    %395 = vst [vmem:[%s394] sm:%s392] %v390
    %s396 = scalar_lea.vmem [#allocation0], 224
    %v397 = vld [vmem:[%s396] sm:%s202]
    %s398 = sshll.u32 1, 4
    %s399 = ssub.s32 %s398, 1
    %s400 = smul.addr 4, 28
    %s401 = scalar_lea.vmem %s1, %s400
    %402 = vst [vmem:[%s401] sm:%s399] %v397
    %s403 = scalar_lea.vmem [#allocation0], 232
    %v404 = vld [vmem:[%s403] sm:%s202]
    %s405 = sshll.u32 1, 4
    %s406 = ssub.s32 %s405, 1
    %s407 = smul.addr 4, 29
    %s408 = scalar_lea.vmem %s1, %s407
    %409 = vst [vmem:[%s408] sm:%s406] %v404
    %s410 = scalar_lea.vmem [#allocation0], 240
    %v411 = vld [vmem:[%s410] sm:%s202]
    %s412 = sshll.u32 1, 4
    %s413 = ssub.s32 %s412, 1
    %s414 = smul.addr 4, 30
    %s415 = scalar_lea.vmem %s1, %s414
    %416 = vst [vmem:[%s415] sm:%s413] %v411
    %s417 = scalar_lea.vmem [#allocation0], 248
    %v418 = vld [vmem:[%s417] sm:%s202]
    %s419 = sshll.u32 1, 4
    %s420 = ssub.s32 %s419, 1
    %s421 = smul.addr 4, 31
    %s422 = scalar_lea.vmem %s1, %s421
    %423 = vst [vmem:[%s422] sm:%s420] %v418
    %s424 = scalar_lea.vmem [#allocation0], 256
    %v425 = vld [vmem:[%s424] sm:%s202]
    %s426 = sshll.u32 1, 4
    %s427 = ssub.s32 %s426, 1
    %s428 = smul.addr 4, 32
    %s429 = scalar_lea.vmem %s1, %s428
    %430 = vst [vmem:[%s429] sm:%s427] %v425
    %s431 = scalar_lea.vmem [#allocation0], 264
    %v432 = vld [vmem:[%s431] sm:%s202]
    %s433 = sshll.u32 1, 4
    %s434 = ssub.s32 %s433, 1
    %s435 = smul.addr 4, 33
    %s436 = scalar_lea.vmem %s1, %s435
    %437 = vst [vmem:[%s436] sm:%s434] %v432
    %s438 = scalar_lea.vmem [#allocation0], 272
    %v439 = vld [vmem:[%s438] sm:%s202]
    %s440 = sshll.u32 1, 4
    %s441 = ssub.s32 %s440, 1
    %s442 = smul.addr 4, 34
    %s443 = scalar_lea.vmem %s1, %s442
    %444 = vst [vmem:[%s443] sm:%s441] %v439
    %s445 = scalar_lea.vmem [#allocation0], 280
    %v446 = vld [vmem:[%s445] sm:%s202]
    %s447 = sshll.u32 1, 4
    %s448 = ssub.s32 %s447, 1
    %s449 = smul.addr 4, 35
    %s450 = scalar_lea.vmem %s1, %s449
    %451 = vst [vmem:[%s450] sm:%s448] %v446
    %s452 = scalar_lea.vmem [#allocation0], 288
    %v453 = vld [vmem:[%s452] sm:%s202]
    %s454 = sshll.u32 1, 4
    %s455 = ssub.s32 %s454, 1
    %s456 = smul.addr 4, 36
    %s457 = scalar_lea.vmem %s1, %s456
    %458 = vst [vmem:[%s457] sm:%s455] %v453
    %s459 = scalar_lea.vmem [#allocation0], 296
    %v460 = vld [vmem:[%s459] sm:%s202]
    %s461 = sshll.u32 1, 4
    %s462 = ssub.s32 %s461, 1
    %s463 = smul.addr 4, 37
    %s464 = scalar_lea.vmem %s1, %s463
    %465 = vst [vmem:[%s464] sm:%s462] %v460
    %s466 = scalar_lea.vmem [#allocation0], 304
    %v467 = vld [vmem:[%s466] sm:%s202]
    %s468 = sshll.u32 1, 4
    %s469 = ssub.s32 %s468, 1
    %s470 = smul.addr 4, 38
    %s471 = scalar_lea.vmem %s1, %s470
    %472 = vst [vmem:[%s471] sm:%s469] %v467
    %s473 = scalar_lea.vmem [#allocation0], 312
    %v474 = vld [vmem:[%s473] sm:%s202]
    %s475 = sshll.u32 1, 4
    %s476 = ssub.s32 %s475, 1
    %s477 = smul.addr 4, 39
    %s478 = scalar_lea.vmem %s1, %s477
    %479 = vst [vmem:[%s478] sm:%s476] %v474
    %s480 = scalar_lea.vmem [#allocation0], 320
    %v481 = vld [vmem:[%s480] sm:%s202]
    %s482 = sshll.u32 1, 4
    %s483 = ssub.s32 %s482, 1
    %s484 = smul.addr 4, 40
    %s485 = scalar_lea.vmem %s1, %s484
    %486 = vst [vmem:[%s485] sm:%s483] %v481
    %s487 = scalar_lea.vmem [#allocation0], 328
    %v488 = vld [vmem:[%s487] sm:%s202]
    %s489 = sshll.u32 1, 4
    %s490 = ssub.s32 %s489, 1
    %s491 = smul.addr 4, 41
    %s492 = scalar_lea.vmem %s1, %s491
    %493 = vst [vmem:[%s492] sm:%s490] %v488
    %s494 = scalar_lea.vmem [#allocation0], 336
    %v495 = vld [vmem:[%s494] sm:%s202]
    %s496 = sshll.u32 1, 4
    %s497 = ssub.s32 %s496, 1
    %s498 = smul.addr 4, 42
    %s499 = scalar_lea.vmem %s1, %s498
    %500 = vst [vmem:[%s499] sm:%s497] %v495
    %s501 = scalar_lea.vmem [#allocation0], 344
    %v502 = vld [vmem:[%s501] sm:%s202]
    %s503 = sshll.u32 1, 4
    %s504 = ssub.s32 %s503, 1
    %s505 = smul.addr 4, 43
    %s506 = scalar_lea.vmem %s1, %s505
    %507 = vst [vmem:[%s506] sm:%s504] %v502
    %s508 = scalar_lea.vmem [#allocation0], 352
    %v509 = vld [vmem:[%s508] sm:%s202]
    %s510 = sshll.u32 1, 4
    %s511 = ssub.s32 %s510, 1
    %s512 = smul.addr 4, 44
    %s513 = scalar_lea.vmem %s1, %s512
    %514 = vst [vmem:[%s513] sm:%s511] %v509
    %s515 = scalar_lea.vmem [#allocation0], 360
    %v516 = vld [vmem:[%s515] sm:%s202]
    %s517 = sshll.u32 1, 4
    %s518 = ssub.s32 %s517, 1
    %s519 = smul.addr 4, 45
    %s520 = scalar_lea.vmem %s1, %s519
    %521 = vst [vmem:[%s520] sm:%s518] %v516
    %s522 = scalar_lea.vmem [#allocation0], 368
    %v523 = vld [vmem:[%s522] sm:%s202]
    %s524 = sshll.u32 1, 4
    %s525 = ssub.s32 %s524, 1
    %s526 = smul.addr 4, 46
    %s527 = scalar_lea.vmem %s1, %s526
    %528 = vst [vmem:[%s527] sm:%s525] %v523
    %s529 = scalar_lea.vmem [#allocation0], 376
    %v530 = vld [vmem:[%s529] sm:%s202]
    %s531 = sshll.u32 1, 4
    %s532 = ssub.s32 %s531, 1
    %s533 = smul.addr 4, 47
    %s534 = scalar_lea.vmem %s1, %s533
    %535 = vst [vmem:[%s534] sm:%s532] %v530

// kernel: _ppnet_adv_forward.1
$region0: #{_ppnet_adv_forward.1}
  #allocation0 [shape = 'u32[]', space=smem, size = 0x4, offset = 0x4, fixed_abs, tag = 'smem constant byte address 0x4 - core index']
  #allocation1 [shape = 'u32[144,128]{1,0:T(1,128)}', space=vmem, size = 0x12000, scoped, tag = 'internal scratch']
  %s0 = inlined_call_operand.vmem [shape: f32[3,16,48], index: 0, kind: input, shape index: {}]
  %s1 = inlined_call_operand.vmem [shape: f32[48,32], index: 1, kind: input, shape index: {}]
  %s2 = inlined_call_operand.vmem [shape: f32[32,32], index: 2, kind: input, shape index: {}]
  %s3 = inlined_call_operand.vmem [shape: f32[8,128], index: 3, kind: output, shape index: {}]
  %s4 = sld [smem:[#allocation0]]
  $region22: #{_ppnet_adv_forward.1} parent=0
    _
  %s6 = ssub.s32 1, %s4
  %s7 = scalar_select 0, %s6, %s4
  // Predicated region
  $region2: #{_ppnet_adv_forward.1} parent=0 // pred_check
    _
  $region3: #{_ppnet_adv_forward.1} parent=0 // pred_check_branch
    %9 = sbr.rel (0) target = $region5
  $region4: #{_ppnet_adv_forward.1} parent=0 // pred_region
    _
  $region5: #{_ppnet_adv_forward.1} parent=0 // pred_fallthru
    _
  // Predicated region
  $region6: #{_ppnet_adv_forward.1} parent=0 // pred_check
    _
  $region7: #{_ppnet_adv_forward.1} parent=0 // pred_check_branch
    %11 = sbr.rel (0) target = $region9
  $region8: #{_ppnet_adv_forward.1} parent=0 // pred_region
    _
  $region9: #{_ppnet_adv_forward.1} parent=0 // pred_fallthru
    _
  // Predicated region
  $region10: #{_ppnet_adv_forward.1} parent=0 // pred_check
    _
  $region11: #{_ppnet_adv_forward.1} parent=0 // pred_check_branch
    %13 = sbr.rel (0) target = $region13
  $region12: #{_ppnet_adv_forward.1} parent=0 // pred_region
    _
  $region13: #{_ppnet_adv_forward.1} parent=0 // pred_fallthru
    _
  %v15 = vld [vmem:[%s0] sm:$0xff]
  %v16 = vld [vmem:[%s0 + $0x8] sm:$0xff]
  %s17 = scalar_lea.vmem %s0, 16
  %v18 = vld [vmem:[%s17] sm:$0xff]
  %v19 = vld [vmem:[%s17 + $0x8] sm:$0xff]
  %s20 = scalar_lea.vmem %s0, 32
  %v21 = vld [vmem:[%s20] sm:$0xff]
  %v22 = vld [vmem:[%s20 + $0x8] sm:$0xff]
  %v23 = vmul.f32 %v15, %v21
  %v24 = vmul.f32 %v16, %v22
  %v25 = vsub.f32 1.0, %v21
  %v26 = vsub.f32 1.0, %v22
  %v27 = vmul.f32 %v18, %v25
  %v28 = vmul.f32 %v19, %v26
  %v29 = vadd.f32 %v23, %v27
  %v30 = vadd.f32 %v24, %v28
  %v31 = vpack.c.bf16 %v30, %v29
  %v32 = vld [vmem:[%s1] sm:$0xff]
  %v33 = vld [vmem:[%s1 + $0x8] sm:$0xff]
  %v34 = vld [vmem:[%s1 + $0x10] sm:$0xff]
  %v35 = vld [vmem:[%s1 + $0x18] sm:$0xff]
  %v36 = vld [vmem:[%s1 + $0x20] sm:$0xff]
  %v37 = vld [vmem:[%s1 + $0x28] sm:$0xff]
  %v38 = vpack.c.bf16 %v33, %v32
  %v39 = vpack.c.bf16 %v35, %v34
  %v40 = vpack.c.bf16 %v37, %v36
  %vm41 = vcmask 392192
  %v43 = vsel %vm41, %v31, 0
  %45 = vmatprep.subr.bf16.mxu0 0
  %46 = vmatpush1.bf16.msra.mxu0 0
  %47 = vmatprep.subr.bf16.mxu0 0
  %48 = vmatpush1.bf16.msra.mxu0 0
  %49 = vmatprep.subr.bf16.mxu0 0
  %50 = vmatpush1.bf16.msra.mxu0 0
  %51 = vmatprep.subr.bf16.mxu0 0
  %52 = vmatpush1.bf16.msra.mxu0 0
  %53 = vmatprep.subr.bf16.mxu0 0
  %54 = vmatpush1.bf16.msra.mxu0 0
  %55 = vmatprep.subr.bf16.mxu0 0
  %56 = vmatpush1.bf16.msra.mxu0 %v40
  %57 = vmatprep.subr.bf16.mxu0 0
  %58 = vmatpush1.bf16.msra.mxu0 %v39
  %59 = vmatprep.subr.bf16.mxu0 0
  %60 = vmatpush1.bf16.msra.mxu0 %v38
  %61 = vmatprep.subr.bf16.mxu0 0
  %62 = vmatpush2.bf16.msra.mxu0 0
  %63 = vmatprep.subr.bf16.mxu0 0
  %64 = vmatpush2.bf16.msra.mxu0 0
  %65 = vmatprep.subr.bf16.mxu0 0
  %66 = vmatpush2.bf16.msra.mxu0 0
  %67 = vmatprep.subr.bf16.mxu0 0
  %68 = vmatpush2.bf16.msra.mxu0 0
  %69 = vmatprep.subr.bf16.mxu0 0
  %70 = vmatpush2.bf16.msra.mxu0 0
  %71 = vmatprep.subr.bf16.mxu0 0
  %72 = vmatpush2.bf16.msra.mxu0 0
  %73 = vmatprep.subr.bf16.mxu0 0
  %74 = vmatpush2.bf16.msra.mxu0 0
  %75 = vmatprep.subr.bf16.mxu0 0
  %76 = vmatpush2.bf16.msra.mxu0 0
  %77 = vmatprep.mubr.bf16.mxu0 0
  %78 = vmatmul.mubr.bf16.gmra.mxu0 %v43
  %v79 = vpop.f32.mrf.mxu0
  %v80 = vadd.f32 0.0, %v79
  %v81 = vpop.f32.mrf.mxu0
  %v82 = vpop.f32.mrf.mxu0
  %v83 = vadd.f32 0.0, %v82
  %v84 = vpop.f32.mrf.mxu0
  %85 = vdwg.mxu0
  %v86 = vmul.f32 %v80, %v80
  %v87 = vmul.f32 %v83, %v83
  %vm88 = vcmask 261120
  %v89 = vsel %vm88, %v86, 0.0
  %90 = vadd.xlane.f32.xlu0 %v89
  %v91 = vpop.xlane.xlu0 %90
  %v92 = vsel %vm88, %v87, 0.0
  %93 = vadd.xlane.f32.xlu0 %v92
  %v94 = vpop.xlane.xlu0 %93
  %v95 = vadd.f32 %v91, 1e-06
  %v96 = vadd.f32 %v94, 1e-06
  %v97 = vrsqrt.pop %v95
  %v98 = vrsqrt.pop %v96
  %v99 = vmul.f32 %v80, %v97
  %v100 = vmul.f32 %v83, %v98
  %v101 = vld [vmem:[%s2] sm:$0xff]
  %v102 = vld [vmem:[%s2 + $0x8] sm:$0xff]
  %v103 = vld [vmem:[%s2 + $0x10] sm:$0xff]
  %v104 = vld [vmem:[%s2 + $0x18] sm:$0xff]
  %v105 = vmul.f32 %v101, %v101
  %v106 = vmul.f32 %v102, %v102
  %v107 = vmul.f32 %v103, %v103
  %v108 = vmul.f32 %v104, %v104
  %v109 = vsel %vm88, %v105, 0.0
  %110 = vadd.xlane.f32.xlu0 %v109
  %v111 = vpop.xlane.xlu0 %110
  %v112 = vsel %vm88, %v106, 0.0
  %113 = vadd.xlane.f32.xlu0 %v112
  %v114 = vpop.xlane.xlu0 %113
  %v115 = vsel %vm88, %v107, 0.0
  %116 = vadd.xlane.f32.xlu0 %v115
  %v117 = vpop.xlane.xlu0 %116
  %v118 = vsel %vm88, %v108, 0.0
  %119 = vadd.xlane.f32.xlu0 %v118
  %v120 = vpop.xlane.xlu0 %119
  %v121 = vadd.f32 %v111, 1e-06
  %v122 = vadd.f32 %v114, 1e-06
  %v123 = vadd.f32 %v117, 1e-06
  %v124 = vadd.f32 %v120, 1e-06
  %v125 = vrsqrt.pop %v121
  %v126 = vrsqrt.pop %v122
  %v127 = vrsqrt.pop %v123
  %v128 = vrsqrt.pop %v124
  %v129 = vmul.f32 %v101, %v125
  %v130 = vmul.f32 %v102, %v126
  %v131 = vmul.f32 %v103, %v127
  %v132 = vmul.f32 %v104, %v128
  %v133 = vpack.c.bf16 %v130, %v129
  %v134 = vpack.c.bf16 %v132, %v131
  %v135 = vpack.c.bf16 %v100, %v99
  %v137 = vsel %vm88, %v133, 0
  %v140 = vsel %vm88, %v134, 0
  %v143 = vsel %vm88, %v135, 0
  %145 = vmatprep.subr.bf16.mxu0 0
  %146 = vmatpush1.bf16.xpose.msra.mxu0 0
  %147 = vmatprep.subr.bf16.mxu0 0
  %148 = vmatpush1.bf16.xpose.msra.mxu0 0
  %149 = vmatprep.subr.bf16.mxu0 0
  %150 = vmatpush1.bf16.xpose.msra.mxu0 0
  %151 = vmatprep.subr.bf16.mxu0 0
  %152 = vmatpush1.bf16.xpose.msra.mxu0 0
  %153 = vmatprep.subr.bf16.mxu0 0
  %154 = vmatpush1.bf16.xpose.msra.mxu0 0
  %155 = vmatprep.subr.bf16.mxu0 0
  %156 = vmatpush1.bf16.xpose.msra.mxu0 0
  %157 = vmatprep.subr.bf16.mxu0 0
  %158 = vmatpush1.bf16.xpose.msra.mxu0 0
  %159 = vmatprep.subr.bf16.mxu0 0
  %160 = vmatpush1.bf16.xpose.msra.mxu0 %v143
  %161 = vmatprep.subr.bf16.mxu0 0
  %162 = vmatpush2.bf16.xpose.msra.mxu0 0
  %163 = vmatprep.subr.bf16.mxu0 0
  %164 = vmatpush2.bf16.xpose.msra.mxu0 0
  %165 = vmatprep.subr.bf16.mxu0 0
  %166 = vmatpush2.bf16.xpose.msra.mxu0 0
  %167 = vmatprep.subr.bf16.mxu0 0
  %168 = vmatpush2.bf16.xpose.msra.mxu0 0
  %169 = vmatprep.subr.bf16.mxu0 0
  %170 = vmatpush2.bf16.xpose.msra.mxu0 0
  %171 = vmatprep.subr.bf16.mxu0 0
  %172 = vmatpush2.bf16.xpose.msra.mxu0 0
  %173 = vmatprep.subr.bf16.mxu0 0
  %174 = vmatpush2.bf16.xpose.msra.mxu0 0
  %175 = vmatprep.subr.bf16.mxu0 0
  %176 = vmatpush2.bf16.xpose.msra.mxu0 0
  %177 = vmatprep.mubr.bf16.mxu0 0
  %178 = vmatmul.mubr.bf16.gmra.mxu0 %v137
  %v179 = vpop.f32.mrf.mxu0
  %v180 = vadd.f32 0.0, %v179
  %v181 = vpop.f32.mrf.mxu0
  %v182 = vpop.f32.mrf.mxu0
  %v183 = vadd.f32 0.0, %v182
  %v184 = vpop.f32.mrf.mxu0
  %185 = vmatprep.mubr.bf16.mxu0 0
  %186 = vmatmul.mubr.bf16.gmra.mxu0 %v140
  %v187 = vpop.f32.mrf.mxu0
  %v188 = vadd.f32 0.0, %v187
  %v189 = vpop.f32.mrf.mxu0
  %v190 = vpop.f32.mrf.mxu0
  %v191 = vadd.f32 0.0, %v190
  %v192 = vpop.f32.mrf.mxu0
  %193 = vdwg.mxu0
  %195 = vrot.lane.b32.xlu0 %v183, 16
  %v196 = vpop.permute.xlu0 %195
  %199 = vrot.lane.b32.xlu0 %v188, 32
  %v200 = vpop.permute.xlu0 %199
  %203 = vrot.lane.b32.xlu0 %v191, 48
  %v204 = vpop.permute.xlu0 %203
  %vm206 = vcmask 130048
  %v207 = vsel %vm206, %v180, %v196
  %v208 = vsel %vm88, %v207, %v200
  %v209 = vsel %vm41, %v208, %v204
  %v210 = vlaneseq
  %v211 = vand.u32 %v210, 127
  %v212 = vshra.s32 %v211, 4
  %v213 = vand.u32 %v211, 15
  %vm214 = vcmask 523264
  %v215 = vsel %vm214, %v209, -inf
  %216 = vmax.xlane.f32.xlu0 %v215
  %v217 = vpop.xlane.xlu0 %216
  %vm218 = vcmp.ge.f32.partialorder %v209, %v217
  %v219 = vsel %vm218, %v211, 64
  %v220 = vsel %vm214, %v219, 2147483647
  %v221 = vand.u32 %v220, 65535
  %v222 = vshra.s32 %v220, 16
  %v223 = vcvt.s32.f32 %v221
  %v224 = vcvt.s32.f32 %v222
  %225 = vmin.xlane.f32.xlu0 %v224
  %v226 = vpop.xlane.xlu0 %225
  %vm227 = vcmp.eq.f32.partialorder %v224, %v226
  %v228 = vsel %vm227, %v223, inf
  %229 = vmin.xlane.f32.xlu0 %v228
  %v230 = vpop.xlane.xlu0 %229
  %v231 = vcvt.f32.s32 %v230
  %v232 = vcvt.f32.s32 %v226
  %v233 = vshll.u32 %v232, 16
  %v234 = vadd.s32 %v233, %v231
  %v235 = vshra.s32 %v234, 4
  %v236 = vand.u32 %v234, 15
  %vm237 = vcmp.ne.s32.totalorder %v212, %v235
  %vm238 = vcmp.ne.s32.totalorder %v213, %v236
  %vm239 = vmand %vm237, %vm238
  %v240 = vadd.f32 %v217, 0.0
  %v241 = vsel %vm239, %v209, -1e+30
  %v242 = vsel %vm214, %v241, -inf
  %243 = vmax.xlane.f32.xlu0 %v242
  %v244 = vpop.xlane.xlu0 %243
  %vm245 = vcmp.ge.f32.partialorder %v241, %v244
  %v246 = vsel %vm245, %v211, 64
  %v247 = vsel %vm214, %v246, 2147483647
  %v248 = vand.u32 %v247, 65535
  %v249 = vshra.s32 %v247, 16
  %v250 = vcvt.s32.f32 %v248
  %v251 = vcvt.s32.f32 %v249
  %252 = vmin.xlane.f32.xlu0 %v251
  %v253 = vpop.xlane.xlu0 %252
  %vm254 = vcmp.eq.f32.partialorder %v251, %v253
  %v255 = vsel %vm254, %v250, inf
  %256 = vmin.xlane.f32.xlu0 %v255
  %v257 = vpop.xlane.xlu0 %256
  %v258 = vcvt.f32.s32 %v257
  %v259 = vcvt.f32.s32 %v253
  %v260 = vshll.u32 %v259, 16
  %v261 = vadd.s32 %v260, %v258
  %v262 = vshra.s32 %v261, 4
  %v263 = vand.u32 %v261, 15
  %vm264 = vcmp.ne.s32.totalorder %v212, %v262
  %vm265 = vmand %vm239, %vm264
  %vm266 = vcmp.ne.s32.totalorder %v213, %v263
  %vm267 = vmand %vm265, %vm266
  %v268 = vadd.f32 %v240, %v244
  %v269 = vsel %vm267, %v209, -1e+30
  %v270 = vsel %vm214, %v269, -inf
  %271 = vmax.xlane.f32.xlu0 %v270
  %v272 = vpop.xlane.xlu0 %271
  %vm273 = vcmp.ge.f32.partialorder %v269, %v272
  %v274 = vsel %vm273, %v211, 64
  %v275 = vsel %vm214, %v274, 2147483647
  %v276 = vand.u32 %v275, 65535
  %v277 = vshra.s32 %v275, 16
  %v278 = vcvt.s32.f32 %v276
  %v279 = vcvt.s32.f32 %v277
  %280 = vmin.xlane.f32.xlu0 %v279
  %v281 = vpop.xlane.xlu0 %280
  %vm282 = vcmp.eq.f32.partialorder %v279, %v281
  %v283 = vsel %vm282, %v278, inf
  %284 = vmin.xlane.f32.xlu0 %v283
  %v285 = vpop.xlane.xlu0 %284
  %v286 = vcvt.f32.s32 %v285
  %v287 = vcvt.f32.s32 %v281
  %v288 = vshll.u32 %v287, 16
  %v289 = vadd.s32 %v288, %v286
  %v290 = vshra.s32 %v289, 4
  %v291 = vand.u32 %v289, 15
  %vm292 = vcmp.ne.s32.totalorder %v212, %v290
  %vm293 = vmand %vm267, %vm292
  %vm294 = vcmp.ne.s32.totalorder %v213, %v291
  %vm295 = vmand %vm293, %vm294
  %v296 = vadd.f32 %v268, %v272
  %v297 = vsel %vm295, %v209, -1e+30
  %v298 = vsel %vm214, %v297, -inf
  %299 = vmax.xlane.f32.xlu0 %v298
  %v300 = vpop.xlane.xlu0 %299
  %v301 = vadd.f32 %v296, %v300
  %302 = vst [vmem:[%s3] sm:$0xff] %v301
  // Predicated region
  $region14: #{_ppnet_adv_forward.1} parent=0 // pred_check
    _
  $region15: #{_ppnet_adv_forward.1} parent=0 // pred_check_branch
    %304 = sbr.rel (0) target = $region17
  $region16: #{_ppnet_adv_forward.1} parent=0 // pred_region
    _
  $region17: #{_ppnet_adv_forward.1} parent=0 // pred_fallthru
    _
  // Predicated region
  $region18: #{_ppnet_adv_forward.1} parent=0 // pred_check
    _
  $region19: #{_ppnet_adv_forward.1} parent=0 // pred_check_branch
    %306 = sbr.rel (0) target = $region21
  $region20: #{_ppnet_adv_forward.1} parent=0 // pred_region
    _
  $region21: #{_ppnet_adv_forward.1} parent=0 // pred_fallthru
    _

</llo_original>
